<compile_context>
chip_gen: v7x
topology: tpu7x:2x2x1
jax: 0.10.0
libtpu: 0.0.40
codegen_flags: <defaults>
</compile_context>

<pallas_src>
import functools

import jax
import jax.numpy as jnp
from jax.experimental import pallas as pl
from jax.experimental.pallas import tpu as pltpu


def _round_up(x, m):
    return (x + m - 1) // m * m


# ----------------------------------------------------------------------------
# Fused matmul kernel (1x1 convs + folded BN, conv1-im2col):
#   relu((A @ W) + bias [+ residual])
# ----------------------------------------------------------------------------
def _mm_kernel(a_ref, w_ref, bias_ref, *rest, relu, has_res):
    if has_res:
        r_ref, o_ref = rest
    else:
        (o_ref,) = rest
    y = jnp.dot(a_ref[...], w_ref[...], preferred_element_type=jnp.float32)
    y = y + bias_ref[...]
    if has_res:
        y = y + r_ref[...].astype(jnp.float32)
    if relu:
        y = jnp.maximum(y, 0.0)
    o_ref[...] = y.astype(o_ref.dtype)


@functools.partial(jax.jit, static_argnames=("relu", "tm", "tn"))
def _mm_call(a, w, bias, res, relu, tm, tn):
    Mp, K = a.shape
    N = w.shape[1]
    grid = (Mp // tm, N // tn)
    in_specs = [
        pl.BlockSpec((tm, K), lambda i, j: (i, 0)),
        pl.BlockSpec((K, tn), lambda i, j: (0, j)),
        pl.BlockSpec((1, tn), lambda i, j: (0, j)),
    ]
    args = [a, w, bias]
    has_res = res is not None
    if has_res:
        in_specs.append(pl.BlockSpec((tm, tn), lambda i, j: (i, j)))
        args.append(res)
    kernel = functools.partial(_mm_kernel, relu=relu, has_res=has_res)
    return pl.pallas_call(
        kernel,
        out_shape=jax.ShapeDtypeStruct((Mp, N), jnp.bfloat16),
        grid=grid,
        in_specs=in_specs,
        out_specs=pl.BlockSpec((tm, tn), lambda i, j: (i, j)),
        compiler_params=pltpu.CompilerParams(
            dimension_semantics=("parallel", "parallel"),
            vmem_limit_bytes=48 * 1024 * 1024),
    )(*args)


def matmul_bias(a, w, bias, res=None, relu=True):
    """a:(M,K) bf16 @ w:(K,N) bf16 + bias (+ residual) (+ relu) -> bf16."""
    M, K = a.shape
    N = w.shape[1]
    has_res = res is not None
    tn = min(N, 512 if M <= 2048 else 256)
    mp8 = _round_up(M, 8)
    # Double-buffered working-set estimate for a single row tile (grid_i == 1).
    est = 2 * mp8 * K * 2 + (4 if has_res else 2) * mp8 * tn * 2 + 4 * K * tn
    if est <= 24 * 1024 * 1024 or M <= 512:
        tm = mp8                       # single row tile -> weights DMA'd once
    else:
        tm = 512                       # (only the conv1 stem hits this path)
        for t in range(512, 255, -8):
            if M % t == 0:
                tm = t
                break
    Mp = _round_up(M, tm)
    if Mp != M:
        a = jnp.pad(a, ((0, Mp - M), (0, 0)))
        if res is not None:
            res = jnp.pad(res, ((0, Mp - M), (0, 0)))
    out = _mm_call(a, w, bias, res, relu=relu, tm=tm, tn=tn)
    return out[:M] if Mp != M else out


# ----------------------------------------------------------------------------
# 3x3 conv (pad=1), stride 1: in-kernel VMEM padding + 9 shifted matmuls per
# row chunk, accumulated in registers.  Folded BN bias + relu in the epilogue.
# ----------------------------------------------------------------------------
def _pick_tr(H, Wp, tn):
    """Largest divisor of H whose flattened chunk (tr*Wp rows) stays small."""
    cap = 256 if tn <= 128 else 128
    best = 1
    for t in range(1, H + 1):
        if H % t == 0 and t * Wp <= cap:
            best = t
    return best


def _conv3x3_s1_kernel(x_ref, w_ref, b_ref, o_ref, pbuf, *, H, W, tr, relu):
    # x_ref: (1,H,W,Cin) bf16   w_ref: (9,Cin,tn) bf16   b_ref: (1,tn) f32
    # o_ref: (1,H,W,tn) bf16    pbuf: ((H+3)*(W+3), Cin) bf16 scratch
    Wp = W + 3
    pbuf[...] = jnp.zeros_like(pbuf)                     # zero padding/borders
    for h in range(H):                                   # interior copy (VMEM)
        pbuf[pl.ds((h + 1) * Wp + 1, W), :] = x_ref[0, h]
    bias = b_ref[...]
    for r0 in range(0, H, tr):
        L = tr * Wp
        acc = None
        for dy in range(3):
            for dx in range(3):
                a = pbuf[pl.ds((r0 + dy) * Wp + dx, L), :]
                d = jnp.dot(a, w_ref[dy * 3 + dx],
                            preferred_element_type=jnp.float32)
                acc = d if acc is None else acc + d
        y = acc + bias
        if relu:
            y = jnp.maximum(y, 0.0)
        for i in range(tr):                              # drop the pad columns
            o_ref[0, r0 + i] = y[i * Wp:i * Wp + W, :].astype(o_ref.dtype)


@functools.partial(jax.jit, static_argnames=("relu", "tn", "tr"))
def _conv3x3_s1_call(x, w, bias, relu, tn, tr):
    B, H, W, Cin = x.shape
    Cout = w.shape[2]
    nct = Cout // tn
    kernel = functools.partial(_conv3x3_s1_kernel, H=H, W=W, tr=tr, relu=relu)
    return pl.pallas_call(
        kernel,
        out_shape=jax.ShapeDtypeStruct((B, H, W, Cout), jnp.bfloat16),
        grid=(nct, B),
        in_specs=[pl.BlockSpec((1, H, W, Cin), lambda n, b: (b, 0, 0, 0)),
                  pl.BlockSpec((9, Cin, tn), lambda n, b: (0, 0, n)),
                  pl.BlockSpec((1, tn), lambda n, b: (0, n))],
        out_specs=pl.BlockSpec((1, H, W, tn), lambda n, b: (b, 0, 0, n)),
        scratch_shapes=[pltpu.VMEM(((H + 3) * (W + 3), Cin), jnp.bfloat16)],
        compiler_params=pltpu.CompilerParams(
            dimension_semantics=("parallel", "parallel"),
            vmem_limit_bytes=32 * 1024 * 1024),
    )(x, w, bias)


# ----------------------------------------------------------------------------
# 3x3 conv (pad=1), stride 2: computed at output resolution from a 4-phase
# (even/odd row/col) split of the padded input.  Tap (dy,dx) reads phase
# (dy%2, dx%2) at offset (dy//2, dx//2) -- 9 contiguous-chunk matmuls.
# ----------------------------------------------------------------------------
def _conv3x3_s2_kernel(p00, p01, p10, p11, w_ref, b_ref, o_ref, *,
                       Ho, Wo, Wop, tr, relu):
    phases = (p00, p01, p10, p11)
    bias = b_ref[...]
    for r0 in range(0, Ho, tr):
        L = tr * Wop
        acc = None
        for dy in range(3):
            for dx in range(3):
                src = phases[(dy % 2) * 2 + (dx % 2)]
                a = src[0, pl.ds((r0 + dy // 2) * Wop + dx // 2, L), :]
                d = jnp.dot(a, w_ref[dy * 3 + dx],
                            preferred_element_type=jnp.float32)
                acc = d if acc is None else acc + d
        y = acc + bias
        if relu:
            y = jnp.maximum(y, 0.0)
        for i in range(tr):
            o_ref[0, r0 + i] = y[i * Wop:i * Wop + Wo, :].astype(o_ref.dtype)


@functools.partial(jax.jit, static_argnames=("relu", "tn", "tr", "ho", "wo"))
def _conv3x3_s2_call(p00, p01, p10, p11, w, bias, relu, tn, tr, ho, wo):
    B, Lp, Cin = p00.shape
    Cout = w.shape[2]
    nct = Cout // tn
    Wop = wo + 2
    kernel = functools.partial(_conv3x3_s2_kernel, Ho=ho, Wo=wo, Wop=Wop,
                               tr=tr, relu=relu)
    phase_spec = pl.BlockSpec((1, Lp, Cin), lambda n, b: (b, 0, 0))
    return pl.pallas_call(
        kernel,
        out_shape=jax.ShapeDtypeStruct((B, ho, wo, Cout), jnp.bfloat16),
        grid=(nct, B),
        in_specs=[phase_spec, phase_spec, phase_spec, phase_spec,
                  pl.BlockSpec((9, Cin, tn), lambda n, b: (0, 0, n)),
                  pl.BlockSpec((1, tn), lambda n, b: (0, n))],
        out_specs=pl.BlockSpec((1, ho, wo, tn), lambda n, b: (b, 0, 0, n)),
        compiler_params=pltpu.CompilerParams(
            dimension_semantics=("parallel", "parallel"),
            vmem_limit_bytes=32 * 1024 * 1024),
    )(p00, p01, p10, p11, w, bias)


def conv3x3_bn(x, p, stride, relu=True):
    """3x3 conv (pad=1) + folded BN (+relu), NHWC bf16, stride 1 or 2."""
    B, H, W, Cin = x.shape
    cout = p['w'].shape[2]
    tn = min(cout, 256)
    if stride == 1:
        tr = _pick_tr(H, W + 3, tn)
        return _conv3x3_s1_call(x, p['w'], p['b'], relu=relu, tn=tn, tr=tr)
    # stride 2: quarter-size even/odd phase inputs, conv at output resolution
    Ho, Wo = H // 2, W // 2
    Hop, Wop = Ho + 2, Wo + 2
    xp = jnp.pad(x, ((0, 0), (1, 3), (1, 3), (0, 0)))
    ph = [xp[:, a::2, b::2, :].reshape(B, Hop * Wop, Cin)
          for a in (0, 1) for b in (0, 1)]
    tr = _pick_tr(Ho, Wop, tn)
    return _conv3x3_s2_call(ph[0], ph[1], ph[2], ph[3], p['w'], p['b'],
                            relu=relu, tn=tn, tr=tr, ho=Ho, wo=Wo)


# ----------------------------------------------------------------------------
# Lane-dense linear decoders (num_outputs = 1); bf16 weights, f32 accumulate.
# ----------------------------------------------------------------------------
def _pick_chunk(rows, cap=2048):
    if rows <= cap:
        return rows
    for r in range(cap, 7, -8):
        if rows % r == 0:
            return r
    return 8


def _dec_kernel(x_ref, w_ref, o_ref, acc_ref, *, nb, rchunk):
    k = pl.program_id(0)

    @pl.when(k == 0)
    def _():
        acc_ref[...] = jnp.zeros_like(acc_ref)

    w = w_ref[...].astype(jnp.float32)                    # (rchunk, 128)
    for b in range(nb):
        prod = x_ref[b].astype(jnp.float32) * w
        acc_ref[b] += jnp.sum(prod.reshape(rchunk // 8, 8, 128), axis=0)

    @pl.when(k == pl.num_programs(0) - 1)
    def _():
        o_ref[...] = acc_ref[...]


@functools.partial(jax.jit, static_argnames=("rchunk",))
def _dec_call(x3, w2, rchunk):
    B, rows, _ = x3.shape
    kernel = functools.partial(_dec_kernel, nb=B, rchunk=rchunk)
    return pl.pallas_call(
        kernel,
        out_shape=jax.ShapeDtypeStruct((B, 8, 128), jnp.float32),
        grid=(rows // rchunk,),
        in_specs=[pl.BlockSpec((B, rchunk, 128), lambda k: (0, k, 0)),
                  pl.BlockSpec((rchunk, 128), lambda k: (k, 0))],
        out_specs=pl.BlockSpec((B, 8, 128), lambda k: (0, 0, 0)),
        scratch_shapes=[pltpu.VMEM((B, 8, 128), jnp.float32)],
        compiler_params=pltpu.CompilerParams(
            dimension_semantics=("arbitrary",)),
    )(x3, w2)


def linear_decoder(x_flat, dec):
    """nn.Linear(K, 1) + .squeeze(); weight stored bf16 as (K//128, 128)."""
    B, K = x_flat.shape
    assert K % 1024 == 0, K
    rows = K // 128
    rchunk = _pick_chunk(rows)
    x3 = x_flat.reshape(B, rows, 128)
    part = _dec_call(x3, dec['w'], rchunk=rchunk)          # (B, 8, 128)
    return jnp.sum(part, axis=(1, 2)) + dec['b']           # (B,)


# ----------------------------------------------------------------------------
# MaxPool 3x3 / stride 2 / pad 1 -- even/odd phase split + in-kernel 9-way max
# ----------------------------------------------------------------------------
def _maxpool_kernel(ee_ref, eo_ref, oe_ref, oo_ref, o_ref, *, ho, wo):
    m = ee_ref[:, :ho, :wo, :]
    m = jnp.maximum(m, ee_ref[:, 1:ho + 1, :wo, :])
    m = jnp.maximum(m, ee_ref[:, :ho, 1:wo + 1, :])
    m = jnp.maximum(m, ee_ref[:, 1:ho + 1, 1:wo + 1, :])
    m = jnp.maximum(m, eo_ref[:, :ho, :wo, :])
    m = jnp.maximum(m, eo_ref[:, 1:ho + 1, :wo, :])
    m = jnp.maximum(m, oe_ref[:, :ho, :wo, :])
    m = jnp.maximum(m, oe_ref[:, :ho, 1:wo + 1, :])
    m = jnp.maximum(m, oo_ref[:, :ho, :wo, :])
    o_ref[...] = m


@jax.jit
def _maxpool_call(ee, eo, oe, oo):
    B, hp1, wp1, C = ee.shape
    ho, wo = hp1 - 1, wp1 - 1
    kernel = functools.partial(_maxpool_kernel, ho=ho, wo=wo)
    return pl.pallas_call(
        kernel,
        out_shape=jax.ShapeDtypeStruct((B, ho, wo, C), ee.dtype),
        grid=(B,),
        in_specs=[pl.BlockSpec((1, hp1, wp1, C), lambda b: (b, 0, 0, 0))] * 4,
        out_specs=pl.BlockSpec((1, ho, wo, C), lambda b: (b, 0, 0, 0)),
        compiler_params=pltpu.CompilerParams(
            dimension_semantics=("parallel",)),
    )(ee, eo, oe, oo)


def maxpool_3x3_s2(x):
    """nn.MaxPool2d(kernel_size=3, stride=2, padding=1), NHWC."""
    xp = jnp.pad(x, ((0, 0), (1, 1), (1, 1), (0, 0)),
                 constant_values=-jnp.inf)
    ee = xp[:, 0::2, 0::2, :]
    eo = xp[:, 0::2, 1::2, :]
    oe = xp[:, 1::2, 0::2, :]
    oo = xp[:, 1::2, 1::2, :]
    return _maxpool_call(ee, eo, oe, oo)


# ----------------------------------------------------------------------------
# Global average pool
# ----------------------------------------------------------------------------
def _avg_kernel(x_ref, o_ref):
    o_ref[...] = jnp.mean(x_ref[...].astype(jnp.float32), axis=1)


@jax.jit
def _avgpool_call(x):  # (B, H*W, C) -> (B, C) f32
    B, HW, C = x.shape
    return pl.pallas_call(
        _avg_kernel,
        out_shape=jax.ShapeDtypeStruct((B, C), jnp.float32),
        grid=(1,),
        in_specs=[pl.BlockSpec((B, HW, C), lambda i: (0, 0, 0))],
        out_specs=pl.BlockSpec((B, C), lambda i: (0, 0)),
    )(x)


# ----------------------------------------------------------------------------
# Plain-JAX glue: im2col (conv1 only), 1x1 conv, bottleneck, parameters
# ----------------------------------------------------------------------------
def im2col(x, kh, kw, stride, pad):
    B, H, W, C = x.shape
    Ho = (H + 2 * pad - kh) // stride + 1
    Wo = (W + 2 * pad - kw) // stride + 1
    xp = jnp.pad(x, ((0, 0), (pad, pad), (pad, pad), (0, 0)))
    cols = [xp[:, i:i + stride * Ho:stride, j:j + stride * Wo:stride, :]
            for i in range(kh) for j in range(kw)]
    patches = jnp.stack(cols, axis=3)                  # (B, Ho, Wo, kh*kw, C)
    return patches.reshape(B * Ho * Wo, kh * kw * C), Ho, Wo


def conv1x1_bn(x, p, stride=1, relu=True, residual=None):
    """1x1 conv + folded BN (+ residual) (+ relu), NHWC bf16."""
    B, H, W, C = x.shape
    if stride > 1:
        x = x[:, ::stride, ::stride, :]
        H, W = x.shape[1], x.shape[2]
    cout = p['w'].shape[1]
    a = x.reshape(B * H * W, C)
    res = residual.reshape(B * H * W, cout) if residual is not None else None
    out = matmul_bias(a, p['w'], p['b'], res=res, relu=relu)
    return out.reshape(B, H, W, cout)


def bottleneck(x, blk):
    s = blk['stride']
    out = conv1x1_bn(x, blk['c1'], 1, True)
    out = conv3x3_bn(out, blk['c2'], s, True)
    if blk['down'] is not None:
        identity = conv1x1_bn(x, blk['down'], s, False)
    else:
        identity = x
    # conv3 + bn3 + residual add + relu fused in one Pallas kernel
    return conv1x1_bn(out, blk['c3'], 1, True, residual=identity)


def run_layer(x, blocks):
    for blk in blocks:
        x = bottleneck(x, blk)
    return x


def _make_conv(key, kh, kw, cin, cout, cin_pad, layout):
    """Random conv+BN params, BN folded into weights, channels padded to >=128,
    stored bf16 in the layout the kernels consume."""
    cout_pad = max(cout, 128)
    k1, k2, k3 = jax.random.split(key, 3)
    w = jax.random.normal(k1, (kh, kw, cin, cout), jnp.float32) * 0.02
    gamma = 1.0 + 0.1 * jax.random.normal(k2, (cout,), jnp.float32)
    beta = 0.05 * jax.random.normal(k3, (cout,), jnp.float32)
    mean = jnp.zeros((cout,), jnp.float32)
    var = jnp.ones((cout,), jnp.float32)
    scale = gamma * jax.lax.rsqrt(var + 1e-5)
    bias = beta - mean * scale
    wf = w * scale                                       # fold BN scale
    wf = jnp.pad(wf, ((0, 0), (0, 0), (0, cin_pad - cin),
                      (0, cout_pad - cout)))
    bias = jnp.pad(bias, (0, cout_pad - cout))
    if layout == "mm":                                   # 1x1 / im2col: (K, N)
        wf = wf.reshape(kh * kw * cin_pad, cout_pad)
    else:                                                # "taps": (9, Cin, N)
        wf = wf.reshape(kh * kw, cin_pad, cout_pad)
    return dict(w=wf.astype(jnp.bfloat16),
                b=bias.reshape(1, cout_pad).astype(jnp.float32))


def build_params(key, num_outputs=1):
    assert num_outputs == 1, "decoders specialized to num_outputs=1"
    idx = [0]

    def nk():
        idx[0] += 1
        return jax.random.fold_in(key, idx[0])

    params = {'conv1': _make_conv(nk(), 7, 7, 3, 64, cin_pad=3, layout="mm")}
    # ResNet-152: (width, #blocks, stride) per layer
    cfgs = [(64, 3, 1), (128, 8, 2), (256, 36, 2), (512, 3, 2)]
    inplanes = 64
    layers = []
    for width, nblocks, stride in cfgs:
        blocks = []
        for bi in range(nblocks):
            s = stride if bi == 0 else 1
            cin_pad = max(inplanes, 128)
            w_pad = max(width, 128)
            blk = dict(
                c1=_make_conv(nk(), 1, 1, inplanes, width,
                              cin_pad=cin_pad, layout="mm"),
                c2=_make_conv(nk(), 3, 3, width, width,
                              cin_pad=w_pad, layout="taps"),
                c3=_make_conv(nk(), 1, 1, width, width * 4,
                              cin_pad=w_pad, layout="mm"),
                stride=s,
                down=(_make_conv(nk(), 1, 1, inplanes, width * 4,
                                 cin_pad=cin_pad, layout="mm")
                      if (s != 1 or inplanes != width * 4) else None))
            blocks.append(blk)
            inplanes = width * 4
        layers.append(blocks)
    params['layers'] = layers

    # Decoder weights stored bf16 as (K//128, 128).  For decoders 1-4 the
    # layout corresponds to NHWC flatten order (for a real torch checkpoint,
    # permute from NCHW flatten order once at load time).  Decoder 0 uses the
    # raw NCHW-flattened input, decoder 5 the pooled features.
    dec_dims = [224 * 224 * 3, 802816, 401408, 200704, 100352, 2048]
    decs = []
    for d in dec_dims:
        kw_, kb_ = jax.random.split(nk())
        decs.append(dict(
            w=(jax.random.normal(kw_, (d // 128, 128), jnp.float32)
               / jnp.sqrt(jnp.float32(d))).astype(jnp.bfloat16),
            b=0.01 * jax.random.normal(kb_, (), jnp.float32)))
    params['dec'] = decs
    return params


# ----------------------------------------------------------------------------
# Forward pass (mirrors ResNet152decoders.forward)
# ----------------------------------------------------------------------------
def forward(x_nchw, params):
    B = x_nchw.shape[0]
    outs = [linear_decoder(x_nchw.reshape(B, -1), params['dec'][0])]

    x = jnp.transpose(x_nchw, (0, 2, 3, 1)).astype(jnp.bfloat16)  # NHWC bf16
    a, Ho, Wo = im2col(x, 7, 7, 2, 3)                              # conv1 stem
    x = matmul_bias(a, params['conv1']['w'], params['conv1']['b'],
                    relu=True).reshape(B, Ho, Wo, -1)              # +bn1+relu
    x = maxpool_3x3_s2(x)

    x = run_layer(x, params['layers'][0])                          # layer1
    outs.append(linear_decoder(x.reshape(B, -1), params['dec'][1]))
    x = run_layer(x, params['layers'][1])                          # layer2
    outs.append(linear_decoder(x.reshape(B, -1), params['dec'][2]))
    x = run_layer(x, params['layers'][2])                          # layer3
    outs.append(linear_decoder(x.reshape(B, -1), params['dec'][3]))
    x = run_layer(x, params['layers'][3])                          # layer4
    outs.append(linear_decoder(x.reshape(B, -1), params['dec'][4]))

    B_, H_, W_, C_ = x.shape
    feat = _avgpool_call(x.reshape(B_, H_ * W_, C_))               # avgpool
    outs.append(linear_decoder(feat, params['dec'][5]))
    return outs


if __name__ == "__main__":
    key = jax.random.PRNGKey(0)
    params = build_params(key, num_outputs=1)
    # input spatial size is dictated by decoders[0] (224*224*3); batch = 2
    x = jax.random.normal(jax.random.fold_in(key, 12345),
                          (2, 3, 224, 224), jnp.float32)
    outs = forward(x, params)
    outs = jax.block_until_ready(outs)
    for o in outs:
        assert o.shape == (2,), o.shape
        assert bool(jnp.all(jnp.isfinite(o)))
    print("KERNEL_OK")
</pallas_src>

<mosaic_0001>
module attributes {stable_mosaic.version = 11 : i64} {
  func.func @_dec_kernel(%arg0: i32, %arg1: memref<2x1176x128xf32, #tpu.memory_space<vmem>>, %arg2: memref<1176x128xbf16, #tpu.memory_space<vmem>>, %arg3: memref<2x8x128xf32, #tpu.memory_space<vmem>>, %arg4: memref<2x8x128xf32, #tpu.memory_space<vmem>>) attributes {dimension_semantics = [#tpu.dimension_semantics<arbitrary>], iteration_bounds = array<i64: 1>, scalar_prefetch = 0 : i64, scratch_operands = 1 : i64, tpu.core_type = #tpu.core_type<tc>, window_params = [{transform_indices = @transform_0, window_bounds = array<i64: 2, 1176, 128>}, {transform_indices = @transform_1, window_bounds = array<i64: 1176, 128>}, {pipeline_mode = #tpu.pipeline_mode<synchronous>, transform_indices = @transform_2, window_bounds = array<i64: 2, 8, 128>}]} {
    %c0_i32 = arith.constant 0 : i32
    %0 = arith.cmpi eq, %arg0, %c0_i32 : i32
    %1 = arith.extui %0 : i1 to i32
    %c0_i32_0 = arith.constant 0 : i32
    %2 = arith.cmpi ne, %1, %c0_i32_0 : i32
    scf.if %2 {
      %cst_22 = arith.constant 0.000000e+00 : f32
      %30 = vector.broadcast %cst_22 : f32 to vector<2x8x128xf32>
      %c0_23 = arith.constant 0 : index
      %c0_24 = arith.constant 0 : index
      %c0_25 = arith.constant 0 : index
      %31 = vector.load %arg4[%c0_23, %c0_24, %c0_25] : memref<2x8x128xf32, #tpu.memory_space<vmem>>, vector<2x8x128xf32>
      tpu.vector_store %arg4[%c0_23, %c0_24, %c0_25], %30 {strides = array<i32>} : memref<2x8x128xf32, #tpu.memory_space<vmem>>, vector<2x8x128xf32>,
    } else {
    }
    %c0 = arith.constant 0 : index
    %c0_1 = arith.constant 0 : index
    %3 = vector.load %arg2[%c0, %c0_1] : memref<1176x128xbf16, #tpu.memory_space<vmem>>, vector<1176x128xbf16>
    %4 = arith.extf %3 : vector<1176x128xbf16> to vector<1176x128xf32>
    %c0_2 = arith.constant 0 : index
    %c0_3 = arith.constant 0 : index
    %c0_4 = arith.constant 0 : index
    %5 = vector.load %arg1[%c0_2, %c0_3, %c0_4] : memref<2x1176x128xf32, #tpu.memory_space<vmem>>, vector<1x1176x128xf32>
    %6 = vector.shape_cast %5 : vector<1x1176x128xf32> to vector<1176x128xf32>
    %7 = arith.mulf %6, %4 : vector<1176x128xf32>
    %c0_5 = arith.constant 0 : index
    %c0_6 = arith.constant 0 : index
    %c0_7 = arith.constant 0 : index
    %8 = vector.load %arg4[%c0_5, %c0_6, %c0_7] : memref<2x8x128xf32, #tpu.memory_space<vmem>>, vector<1x8x128xf32>
    %9 = vector.shape_cast %8 : vector<1x8x128xf32> to vector<8x128xf32>
    %10 = vector.shape_cast %7 : vector<1176x128xf32> to vector<147x8x128xf32>
    %cst = arith.constant dense<0.000000e+00> : vector<8x128xf32>
    %11 = vector.multi_reduction <add>, %10, %cst [0] : vector<147x8x128xf32> to vector<8x128xf32>
    %12 = arith.addf %9, %11 : vector<8x128xf32>
    %c0_8 = arith.constant 0 : index
    %c0_9 = arith.constant 0 : index
    %c0_10 = arith.constant 0 : index
    %13 = vector.load %arg4[%c0_8, %c0_9, %c0_10] : memref<2x8x128xf32, #tpu.memory_space<vmem>>, vector<1x8x128xf32>
    %14 = vector.shape_cast %13 : vector<1x8x128xf32> to vector<8x128xf32>
    %15 = vector.shape_cast %12 : vector<8x128xf32> to vector<1x8x128xf32>
    tpu.vector_store %arg4[%c0_8, %c0_9, %c0_10], %15 {strides = array<i32>} : memref<2x8x128xf32, #tpu.memory_space<vmem>>, vector<1x8x128xf32>,
    %c1 = arith.constant 1 : index
    %c0_11 = arith.constant 0 : index
    %c0_12 = arith.constant 0 : index
    %16 = vector.load %arg1[%c1, %c0_11, %c0_12] : memref<2x1176x128xf32, #tpu.memory_space<vmem>>, vector<1x1176x128xf32>
    %17 = vector.shape_cast %16 : vector<1x1176x128xf32> to vector<1176x128xf32>
    %18 = arith.mulf %17, %4 : vector<1176x128xf32>
    %c1_13 = arith.constant 1 : index
    %c0_14 = arith.constant 0 : index
    %c0_15 = arith.constant 0 : index
    %19 = vector.load %arg4[%c1_13, %c0_14, %c0_15] : memref<2x8x128xf32, #tpu.memory_space<vmem>>, vector<1x8x128xf32>
    %20 = vector.shape_cast %19 : vector<1x8x128xf32> to vector<8x128xf32>
    %21 = vector.shape_cast %18 : vector<1176x128xf32> to vector<147x8x128xf32>
    %cst_16 = arith.constant dense<0.000000e+00> : vector<8x128xf32>
    %22 = vector.multi_reduction <add>, %21, %cst_16 [0] : vector<147x8x128xf32> to vector<8x128xf32>
    %23 = arith.addf %20, %22 : vector<8x128xf32>
    %c1_17 = arith.constant 1 : index
    %c0_18 = arith.constant 0 : index
    %c0_19 = arith.constant 0 : index
    %24 = vector.load %arg4[%c1_17, %c0_18, %c0_19] : memref<2x8x128xf32, #tpu.memory_space<vmem>>, vector<1x8x128xf32>
    %25 = vector.shape_cast %24 : vector<1x8x128xf32> to vector<8x128xf32>
    %26 = vector.shape_cast %23 : vector<8x128xf32> to vector<1x8x128xf32>
    tpu.vector_store %arg4[%c1_17, %c0_18, %c0_19], %26 {strides = array<i32>} : memref<2x8x128xf32, #tpu.memory_space<vmem>>, vector<1x8x128xf32>,
    %c0_i32_20 = arith.constant 0 : i32
    %27 = arith.cmpi eq, %arg0, %c0_i32_20 : i32
    %28 = arith.extui %27 : i1 to i32
    %c0_i32_21 = arith.constant 0 : i32
    %29 = arith.cmpi ne, %28, %c0_i32_21 : i32
    scf.if %29 {
      %c0_22 = arith.constant 0 : index
      %c0_23 = arith.constant 0 : index
      %c0_24 = arith.constant 0 : index
      %30 = vector.load %arg4[%c0_22, %c0_23, %c0_24] : memref<2x8x128xf32, #tpu.memory_space<vmem>>, vector<2x8x128xf32>
      %c0_25 = arith.constant 0 : index
      %c0_26 = arith.constant 0 : index
      %c0_27 = arith.constant 0 : index
      %31 = vector.load %arg3[%c0_25, %c0_26, %c0_27] : memref<2x8x128xf32, #tpu.memory_space<vmem>>, vector<2x8x128xf32>
      tpu.vector_store %arg3[%c0_25, %c0_26, %c0_27], %30 {strides = array<i32>} : memref<2x8x128xf32, #tpu.memory_space<vmem>>, vector<2x8x128xf32>,
    } else {
    }
    return
  }
  func.func @transform_0(%arg0: i32) -> (i32, i32, i32) {
    %c0_i32 = arith.constant 0 : i32
    %c0_i32_0 = arith.constant 0 : i32
    %c0_i32_1 = arith.constant 0 : i32
    return %c0_i32, %arg0, %c0_i32_0 : i32, i32, i32
  }
  func.func @transform_1(%arg0: i32) -> (i32, i32) {
    %c0_i32 = arith.constant 0 : i32
    %c0_i32_0 = arith.constant 0 : i32
    return %arg0, %c0_i32 : i32, i32
  }
  func.func @transform_2(%arg0: i32) -> (i32, i32, i32) {
    %c0_i32 = arith.constant 0 : i32
    %c0_i32_0 = arith.constant 0 : i32
    %c0_i32_1 = arith.constant 0 : i32
    %c0_i32_2 = arith.constant 0 : i32
    return %c0_i32, %c0_i32_0, %c0_i32_1 : i32, i32, i32
  }
}

</mosaic_0001>

<llo_original>
// kernel: _dec_call.1
$region0: #{_dec_call.1}
  #allocation0 [shape = 'u32[]', space=smem, size = 0x4, offset = 0x4, fixed_abs, tag = 'smem constant byte address 0x4 - core index']
  #allocation1 [shape = 'u32[144,128]{1,0:T(1,128)}', space=vmem, size = 0x12000, scoped, tag = 'internal scratch']
  #allocation2 [shape = 'f32[2,8,128]{2,1,0:T(8,128)}', space=vmem, size = 0x2000, scoped, tag = 'scratch operand']
  %s0 = inlined_call_operand.hbm [shape: f32[2,1176,128], index: 0, kind: input, shape index: {}]
  %s1 = inlined_call_operand.hbm [shape: bf16[1176,128], index: 1, kind: input, shape index: {}]
  %s2 = inlined_call_operand.hbm [shape: f32[2,8,128], index: 2, kind: output, shape index: {}]
  %s3 = sld [smem:[#allocation0]]
  $region34: #{_dec_call.1} parent=0
    _
  %s5 = ssub.s32 1, %s3
  %s6 = scalar_select 0, %s5, %s3
  $region1: #{_dec_call.1} parent=0
    #allocation3 [shape = 'u8[1204224]{0}', space=vmem, size = 0x126000, scoped, tag = 'input window, operand 0, single buffered']
    #allocation4 [shape = 's32[1]{0}', space=sflag, size = 0x4, scoped, tag = 'scoped memory for _dec_call.1']
    #allocation5 [shape = 's32[1]{0}', space=sflag, size = 0x4, scoped, tag = 'scoped memory for _dec_call.1']
    #allocation6 [shape = 'u8[301056]{0}', space=vmem, size = 0x49800, scoped, tag = 'input window, operand 1, single buffered']
    #allocation7 [shape = 's32[1]{0}', space=sflag, size = 0x4, scoped, tag = 'scoped memory for _dec_call.1']
    #allocation8 [shape = 'u8[8192]{0}', space=vmem, size = 0x2000, scoped, tag = 'output window, operand 0, single buffered']
    %7 = vsyncpa [#allocation4], 0
    %8 = vsyncpa [#allocation7], 0
    %9 = vsyncpa [#allocation5], 0
    // Predicated region
    $region2: #{_dec_call.1} parent=1 // pred_check
      _
    $region3: #{_dec_call.1} parent=1 // pred_check_branch
      %11 = sbr.rel (0) target = $region5
    $region4: #{_dec_call.1} parent=1 // pred_region
      %s13 = ssub.s32 37632, 37632
      %14 = vsyncadd [#allocation4], %s13
      %s15 = sshll.u32 [#allocation3], 4
      %s16 = int_to_ptr.vmem [resolvable:$true] %s15
      %21 = dma.hbm_to_vmem [thread:$0]  %s0, 37632, %s16, [#allocation4], 128, 128, 8
    $region5: #{_dec_call.1} parent=1 // pred_fallthru
      _
    // Predicated region
    $region6: #{_dec_call.1} parent=1 // pred_check
      _
    $region7: #{_dec_call.1} parent=1 // pred_check_branch
      %23 = sbr.rel (0) target = $region9
    $region8: #{_dec_call.1} parent=1 // pred_region
      %s25 = ssub.s32 9408, 9408
      %26 = vsyncadd [#allocation7], %s25
      %s27 = sshll.u32 [#allocation6], 4
      %s28 = int_to_ptr.vmem [resolvable:$true] %s27
      %33 = dma.hbm_to_vmem [thread:$0]  %s1, 9408, %s28, [#allocation7], 64, 64, 4
    $region9: #{_dec_call.1} parent=1 // pred_fallthru
      _
    // Predicated region
    $region10: #{_dec_call.1} parent=1 // pred_check
      _
    $region11: #{_dec_call.1} parent=1 // pred_check_branch
      %35 = sbr.rel (0) target = $region13
    $region12: #{_dec_call.1} parent=1 // pred_region
      %36 = dma.done [#allocation4], 37632
    $region13: #{_dec_call.1} parent=1 // pred_fallthru
      _
    // Predicated region
    $region14: #{_dec_call.1} parent=1 // pred_check
      _
    $region15: #{_dec_call.1} parent=1 // pred_check_branch
      %38 = sbr.rel (0) target = $region17
    $region16: #{_dec_call.1} parent=1 // pred_region
      %39 = dma.done [#allocation7], 9408
    $region17: #{_dec_call.1} parent=1 // pred_fallthru
      _
    %p40 = scmp.eq.s32.totalorder 0, 0
    // Predicated region
    $region18: #{_dec_call.1} parent=1 // pred_check
      %p41 = pneg %p40
    $region19: #{_dec_call.1} parent=1 // pred_check_branch
      %43 = sbr.rel (%p41) target = $region21
    $region20: #{_dec_call.1} parent=1 // pred_region
      %44 = vst [vmem:[#allocation2] sm:$0xff] 0.0
      %45 = vst [vmem:[#allocation2 + $0x8] sm:$0xff] 0.0
    $region21: #{_dec_call.1} parent=1 // pred_fallthru
      _
    %v46 = vld [vmem:[#allocation6] sm:$0xf]
    %v47 = vld [vmem:[#allocation6 + $0x4] sm:$0xf]
    %v48 = vld [vmem:[#allocation6 + $0x8] sm:$0xf]
    %v49 = vld [vmem:[#allocation6 + $0xc] sm:$0xf]
    %v50 = vld [vmem:[#allocation6 + $0x10] sm:$0xf]
    %v51 = vld [vmem:[#allocation6 + $0x14] sm:$0xf]
    %v52 = vld [vmem:[#allocation6 + $0x18] sm:$0xf]
    %v53 = vld [vmem:[#allocation6 + $0x1c] sm:$0xf]
    %v54 = vld [vmem:[#allocation6 + $0x20] sm:$0xf]
    %v55 = vld [vmem:[#allocation6 + $0x24] sm:$0xf]
    %v56 = vld [vmem:[#allocation6 + $0x28] sm:$0xf]
    %v57 = vld [vmem:[#allocation6 + $0x2c] sm:$0xf]
    %v58 = vld [vmem:[#allocation6 + $0x30] sm:$0xf]
    %v59 = vld [vmem:[#allocation6 + $0x34] sm:$0xf]
    %v60 = vld [vmem:[#allocation6 + $0x38] sm:$0xf]
    %v61 = vld [vmem:[#allocation6 + $0x3c] sm:$0xf]
    %v62 = vld [vmem:[#allocation6 + $0x40] sm:$0xf]
    %v63 = vld [vmem:[#allocation6 + $0x44] sm:$0xf]
    %v64 = vld [vmem:[#allocation6 + $0x48] sm:$0xf]
    %v65 = vld [vmem:[#allocation6 + $0x4c] sm:$0xf]
    %v66 = vld [vmem:[#allocation6 + $0x50] sm:$0xf]
    %v67 = vld [vmem:[#allocation6 + $0x54] sm:$0xf]
    %v68 = vld [vmem:[#allocation6 + $0x58] sm:$0xf]
    %v69 = vld [vmem:[#allocation6 + $0x5c] sm:$0xf]
    %v70 = vld [vmem:[#allocation6 + $0x60] sm:$0xf]
    %v71 = vld [vmem:[#allocation6 + $0x64] sm:$0xf]
    %v72 = vld [vmem:[#allocation6 + $0x68] sm:$0xf]
    %v73 = vld [vmem:[#allocation6 + $0x6c] sm:$0xf]
    %v74 = vld [vmem:[#allocation6 + $0x70] sm:$0xf]
    %v75 = vld [vmem:[#allocation6 + $0x74] sm:$0xf]
    %v76 = vld [vmem:[#allocation6 + $0x78] sm:$0xf]
    %v77 = vld [vmem:[#allocation6 + $0x7c] sm:$0xf]
    %v78 = vld [vmem:[#allocation6 + $0x80] sm:$0xf]
    %v79 = vld [vmem:[#allocation6 + $0x84] sm:$0xf]
    %v80 = vld [vmem:[#allocation6 + $0x88] sm:$0xf]
    %v81 = vld [vmem:[#allocation6 + $0x8c] sm:$0xf]
    %v82 = vld [vmem:[#allocation6 + $0x90] sm:$0xf]
    %v83 = vld [vmem:[#allocation6 + $0x94] sm:$0xf]
    %v84 = vld [vmem:[#allocation6 + $0x98] sm:$0xf]
    %v85 = vld [vmem:[#allocation6 + $0x9c] sm:$0xf]
    %v86 = vld [vmem:[#allocation6 + $0xa0] sm:$0xf]
    %v87 = vld [vmem:[#allocation6 + $0xa4] sm:$0xf]
    %v88 = vld [vmem:[#allocation6 + $0xa8] sm:$0xf]
    %v89 = vld [vmem:[#allocation6 + $0xac] sm:$0xf]
    %v90 = vld [vmem:[#allocation6 + $0xb0] sm:$0xf]
    %v91 = vld [vmem:[#allocation6 + $0xb4] sm:$0xf]
    %v92 = vld [vmem:[#allocation6 + $0xb8] sm:$0xf]
    %v93 = vld [vmem:[#allocation6 + $0xbc] sm:$0xf]
    %v94 = vld [vmem:[#allocation6 + $0xc0] sm:$0xf]
    %v95 = vld [vmem:[#allocation6 + $0xc4] sm:$0xf]
    %v96 = vld [vmem:[#allocation6 + $0xc8] sm:$0xf]
    %v97 = vld [vmem:[#allocation6 + $0xcc] sm:$0xf]
    %v98 = vld [vmem:[#allocation6 + $0xd0] sm:$0xf]
    %v99 = vld [vmem:[#allocation6 + $0xd4] sm:$0xf]
    %v100 = vld [vmem:[#allocation6 + $0xd8] sm:$0xf]
    %v101 = vld [vmem:[#allocation6 + $0xdc] sm:$0xf]
    %v102 = vld [vmem:[#allocation6 + $0xe0] sm:$0xf]
    %v103 = vld [vmem:[#allocation6 + $0xe4] sm:$0xf]
    %v104 = vld [vmem:[#allocation6 + $0xe8] sm:$0xf]
    %v105 = vld [vmem:[#allocation6 + $0xec] sm:$0xf]
    %v106 = vld [vmem:[#allocation6 + $0xf0] sm:$0xf]
    %v107 = vld [vmem:[#allocation6 + $0xf4] sm:$0xf]
    %v108 = vld [vmem:[#allocation6 + $0xf8] sm:$0xf]
    %v109 = vld [vmem:[#allocation6 + $0xfc] sm:$0xf]
    %v110 = vld [vmem:[#allocation6 + $0x100] sm:$0xf]
    %v111 = vld [vmem:[#allocation6 + $0x104] sm:$0xf]
    %v112 = vld [vmem:[#allocation6 + $0x108] sm:$0xf]
    %v113 = vld [vmem:[#allocation6 + $0x10c] sm:$0xf]
    %v114 = vld [vmem:[#allocation6 + $0x110] sm:$0xf]
    %v115 = vld [vmem:[#allocation6 + $0x114] sm:$0xf]
    %v116 = vld [vmem:[#allocation6 + $0x118] sm:$0xf]
    %v117 = vld [vmem:[#allocation6 + $0x11c] sm:$0xf]
    %v118 = vld [vmem:[#allocation6 + $0x120] sm:$0xf]
    %v119 = vld [vmem:[#allocation6 + $0x124] sm:$0xf]
    %v120 = vld [vmem:[#allocation6 + $0x128] sm:$0xf]
    %v121 = vld [vmem:[#allocation6 + $0x12c] sm:$0xf]
    %v122 = vld [vmem:[#allocation6 + $0x130] sm:$0xf]
    %v123 = vld [vmem:[#allocation6 + $0x134] sm:$0xf]
    %v124 = vld [vmem:[#allocation6 + $0x138] sm:$0xf]
    %v125 = vld [vmem:[#allocation6 + $0x13c] sm:$0xf]
    %v126 = vld [vmem:[#allocation6 + $0x140] sm:$0xf]
    %v127 = vld [vmem:[#allocation6 + $0x144] sm:$0xf]
    %v128 = vld [vmem:[#allocation6 + $0x148] sm:$0xf]
    %v129 = vld [vmem:[#allocation6 + $0x14c] sm:$0xf]
    %v130 = vld [vmem:[#allocation6 + $0x150] sm:$0xf]
    %v131 = vld [vmem:[#allocation6 + $0x154] sm:$0xf]
    %v132 = vld [vmem:[#allocation6 + $0x158] sm:$0xf]
    %v133 = vld [vmem:[#allocation6 + $0x15c] sm:$0xf]
    %v134 = vld [vmem:[#allocation6 + $0x160] sm:$0xf]
    %v135 = vld [vmem:[#allocation6 + $0x164] sm:$0xf]
    %v136 = vld [vmem:[#allocation6 + $0x168] sm:$0xf]
    %v137 = vld [vmem:[#allocation6 + $0x16c] sm:$0xf]
    %v138 = vld [vmem:[#allocation6 + $0x170] sm:$0xf]
    %v139 = vld [vmem:[#allocation6 + $0x174] sm:$0xf]
    %v140 = vld [vmem:[#allocation6 + $0x178] sm:$0xf]
    %v141 = vld [vmem:[#allocation6 + $0x17c] sm:$0xf]
    %v142 = vld [vmem:[#allocation6 + $0x180] sm:$0xf]
    %v143 = vld [vmem:[#allocation6 + $0x184] sm:$0xf]
    %v144 = vld [vmem:[#allocation6 + $0x188] sm:$0xf]
    %v145 = vld [vmem:[#allocation6 + $0x18c] sm:$0xf]
    %v146 = vld [vmem:[#allocation6 + $0x190] sm:$0xf]
    %v147 = vld [vmem:[#allocation6 + $0x194] sm:$0xf]
    %v148 = vld [vmem:[#allocation6 + $0x198] sm:$0xf]
    %v149 = vld [vmem:[#allocation6 + $0x19c] sm:$0xf]
    %v150 = vld [vmem:[#allocation6 + $0x1a0] sm:$0xf]
    %v151 = vld [vmem:[#allocation6 + $0x1a4] sm:$0xf]
    %v152 = vld [vmem:[#allocation6 + $0x1a8] sm:$0xf]
    %v153 = vld [vmem:[#allocation6 + $0x1ac] sm:$0xf]
    %v154 = vld [vmem:[#allocation6 + $0x1b0] sm:$0xf]
    %v155 = vld [vmem:[#allocation6 + $0x1b4] sm:$0xf]
    %v156 = vld [vmem:[#allocation6 + $0x1b8] sm:$0xf]
    %v157 = vld [vmem:[#allocation6 + $0x1bc] sm:$0xf]
    %v158 = vld [vmem:[#allocation6 + $0x1c0] sm:$0xf]
    %v159 = vld [vmem:[#allocation6 + $0x1c4] sm:$0xf]
    %v160 = vld [vmem:[#allocation6 + $0x1c8] sm:$0xf]
    %v161 = vld [vmem:[#allocation6 + $0x1cc] sm:$0xf]
    %v162 = vld [vmem:[#allocation6 + $0x1d0] sm:$0xf]
    %v163 = vld [vmem:[#allocation6 + $0x1d4] sm:$0xf]
    %v164 = vld [vmem:[#allocation6 + $0x1d8] sm:$0xf]
    %v165 = vld [vmem:[#allocation6 + $0x1dc] sm:$0xf]
    %v166 = vld [vmem:[#allocation6 + $0x1e0] sm:$0xf]
    %v167 = vld [vmem:[#allocation6 + $0x1e4] sm:$0xf]
    %v168 = vld [vmem:[#allocation6 + $0x1e8] sm:$0xf]
    %v169 = vld [vmem:[#allocation6 + $0x1ec] sm:$0xf]
    %v170 = vld [vmem:[#allocation6 + $0x1f0] sm:$0xf]
    %v171 = vld [vmem:[#allocation6 + $0x1f4] sm:$0xf]
    %v172 = vld [vmem:[#allocation6 + $0x1f8] sm:$0xf]
    %v173 = vld [vmem:[#allocation6 + $0x1fc] sm:$0xf]
    %v174 = vld [vmem:[#allocation6 + $0x200] sm:$0xf]
    %v175 = vld [vmem:[#allocation6 + $0x204] sm:$0xf]
    %v176 = vld [vmem:[#allocation6 + $0x208] sm:$0xf]
    %v177 = vld [vmem:[#allocation6 + $0x20c] sm:$0xf]
    %v178 = vld [vmem:[#allocation6 + $0x210] sm:$0xf]
    %v179 = vld [vmem:[#allocation6 + $0x214] sm:$0xf]
    %v180 = vld [vmem:[#allocation6 + $0x218] sm:$0xf]
    %v181 = vld [vmem:[#allocation6 + $0x21c] sm:$0xf]
    %v182 = vld [vmem:[#allocation6 + $0x220] sm:$0xf]
    %v183 = vld [vmem:[#allocation6 + $0x224] sm:$0xf]
    %v184 = vld [vmem:[#allocation6 + $0x228] sm:$0xf]
    %v185 = vld [vmem:[#allocation6 + $0x22c] sm:$0xf]
    %v186 = vld [vmem:[#allocation6 + $0x230] sm:$0xf]
    %v187 = vld [vmem:[#allocation6 + $0x234] sm:$0xf]
    %v188 = vld [vmem:[#allocation6 + $0x238] sm:$0xf]
    %v189 = vld [vmem:[#allocation6 + $0x23c] sm:$0xf]
    %v190 = vld [vmem:[#allocation6 + $0x240] sm:$0xf]
    %v191 = vld [vmem:[#allocation6 + $0x244] sm:$0xf]
    %v192 = vld [vmem:[#allocation6 + $0x248] sm:$0xf]
    %v193 = vunpack.c.l.bf16 %v46
    %v194 = vunpack.c.l.bf16 %v47
    %v195 = vunpack.c.l.bf16 %v48
    %v196 = vunpack.c.l.bf16 %v49
    %v197 = vunpack.c.l.bf16 %v50
    %v198 = vunpack.c.l.bf16 %v51
    %v199 = vunpack.c.l.bf16 %v52
    %v200 = vunpack.c.l.bf16 %v53
    %v201 = vunpack.c.l.bf16 %v54
    %v202 = vunpack.c.l.bf16 %v55
    %v203 = vunpack.c.l.bf16 %v56
    %v204 = vunpack.c.l.bf16 %v57
    %v205 = vunpack.c.l.bf16 %v58
    %v206 = vunpack.c.l.bf16 %v59
    %v207 = vunpack.c.l.bf16 %v60
    %v208 = vunpack.c.l.bf16 %v61
    %v209 = vunpack.c.l.bf16 %v62
    %v210 = vunpack.c.l.bf16 %v63
    %v211 = vunpack.c.l.bf16 %v64
    %v212 = vunpack.c.l.bf16 %v65
    %v213 = vunpack.c.l.bf16 %v66
    %v214 = vunpack.c.l.bf16 %v67
    %v215 = vunpack.c.l.bf16 %v68
    %v216 = vunpack.c.l.bf16 %v69
    %v217 = vunpack.c.l.bf16 %v70
    %v218 = vunpack.c.l.bf16 %v71
    %v219 = vunpack.c.l.bf16 %v72
    %v220 = vunpack.c.l.bf16 %v73
    %v221 = vunpack.c.l.bf16 %v74
    %v222 = vunpack.c.l.bf16 %v75
    %v223 = vunpack.c.l.bf16 %v76
    %v224 = vunpack.c.l.bf16 %v77
    %v225 = vunpack.c.l.bf16 %v78
    %v226 = vunpack.c.l.bf16 %v79
    %v227 = vunpack.c.l.bf16 %v80
    %v228 = vunpack.c.l.bf16 %v81
    %v229 = vunpack.c.l.bf16 %v82
    %v230 = vunpack.c.l.bf16 %v83
    %v231 = vunpack.c.l.bf16 %v84
    %v232 = vunpack.c.l.bf16 %v85
    %v233 = vunpack.c.l.bf16 %v86
    %v234 = vunpack.c.l.bf16 %v87
    %v235 = vunpack.c.l.bf16 %v88
    %v236 = vunpack.c.l.bf16 %v89
    %v237 = vunpack.c.l.bf16 %v90
    %v238 = vunpack.c.l.bf16 %v91
    %v239 = vunpack.c.l.bf16 %v92
    %v240 = vunpack.c.l.bf16 %v93
    %v241 = vunpack.c.l.bf16 %v94
    %v242 = vunpack.c.l.bf16 %v95
    %v243 = vunpack.c.l.bf16 %v96
    %v244 = vunpack.c.l.bf16 %v97
    %v245 = vunpack.c.l.bf16 %v98
    %v246 = vunpack.c.l.bf16 %v99
    %v247 = vunpack.c.l.bf16 %v100
    %v248 = vunpack.c.l.bf16 %v101
    %v249 = vunpack.c.l.bf16 %v102
    %v250 = vunpack.c.l.bf16 %v103
    %v251 = vunpack.c.l.bf16 %v104
    %v252 = vunpack.c.l.bf16 %v105
    %v253 = vunpack.c.l.bf16 %v106
    %v254 = vunpack.c.l.bf16 %v107
    %v255 = vunpack.c.l.bf16 %v108
    %v256 = vunpack.c.l.bf16 %v109
    %v257 = vunpack.c.l.bf16 %v110
    %v258 = vunpack.c.l.bf16 %v111
    %v259 = vunpack.c.l.bf16 %v112
    %v260 = vunpack.c.l.bf16 %v113
    %v261 = vunpack.c.l.bf16 %v114
    %v262 = vunpack.c.l.bf16 %v115
    %v263 = vunpack.c.l.bf16 %v116
    %v264 = vunpack.c.l.bf16 %v117
    %v265 = vunpack.c.l.bf16 %v118
    %v266 = vunpack.c.l.bf16 %v119
    %v267 = vunpack.c.l.bf16 %v120
    %v268 = vunpack.c.l.bf16 %v121
    %v269 = vunpack.c.l.bf16 %v122
    %v270 = vunpack.c.l.bf16 %v123
    %v271 = vunpack.c.l.bf16 %v124
    %v272 = vunpack.c.l.bf16 %v125
    %v273 = vunpack.c.l.bf16 %v126
    %v274 = vunpack.c.l.bf16 %v127
    %v275 = vunpack.c.l.bf16 %v128
    %v276 = vunpack.c.l.bf16 %v129
    %v277 = vunpack.c.l.bf16 %v130
    %v278 = vunpack.c.l.bf16 %v131
    %v279 = vunpack.c.l.bf16 %v132
    %v280 = vunpack.c.l.bf16 %v133
    %v281 = vunpack.c.l.bf16 %v134
    %v282 = vunpack.c.l.bf16 %v135
    %v283 = vunpack.c.l.bf16 %v136
    %v284 = vunpack.c.l.bf16 %v137
    %v285 = vunpack.c.l.bf16 %v138
    %v286 = vunpack.c.l.bf16 %v139
    %v287 = vunpack.c.l.bf16 %v140
    %v288 = vunpack.c.l.bf16 %v141
    %v289 = vunpack.c.l.bf16 %v142
    %v290 = vunpack.c.l.bf16 %v143
    %v291 = vunpack.c.l.bf16 %v144
    %v292 = vunpack.c.l.bf16 %v145
    %v293 = vunpack.c.l.bf16 %v146
    %v294 = vunpack.c.l.bf16 %v147
    %v295 = vunpack.c.l.bf16 %v148
    %v296 = vunpack.c.l.bf16 %v149
    %v297 = vunpack.c.l.bf16 %v150
    %v298 = vunpack.c.l.bf16 %v151
    %v299 = vunpack.c.l.bf16 %v152
    %v300 = vunpack.c.l.bf16 %v153
    %v301 = vunpack.c.l.bf16 %v154
    %v302 = vunpack.c.l.bf16 %v155
    %v303 = vunpack.c.l.bf16 %v156
    %v304 = vunpack.c.l.bf16 %v157
    %v305 = vunpack.c.l.bf16 %v158
    %v306 = vunpack.c.l.bf16 %v159
    %v307 = vunpack.c.l.bf16 %v160
    %v308 = vunpack.c.l.bf16 %v161
    %v309 = vunpack.c.l.bf16 %v162
    %v310 = vunpack.c.l.bf16 %v163
    %v311 = vunpack.c.l.bf16 %v164
    %v312 = vunpack.c.l.bf16 %v165
    %v313 = vunpack.c.l.bf16 %v166
    %v314 = vunpack.c.l.bf16 %v167
    %v315 = vunpack.c.l.bf16 %v168
    %v316 = vunpack.c.l.bf16 %v169
    %v317 = vunpack.c.l.bf16 %v170
    %v318 = vunpack.c.l.bf16 %v171
    %v319 = vunpack.c.l.bf16 %v172
    %v320 = vunpack.c.l.bf16 %v173
    %v321 = vunpack.c.l.bf16 %v174
    %v322 = vunpack.c.l.bf16 %v175
    %v323 = vunpack.c.l.bf16 %v176
    %v324 = vunpack.c.l.bf16 %v177
    %v325 = vunpack.c.l.bf16 %v178
    %v326 = vunpack.c.l.bf16 %v179
    %v327 = vunpack.c.l.bf16 %v180
    %v328 = vunpack.c.l.bf16 %v181
    %v329 = vunpack.c.l.bf16 %v182
    %v330 = vunpack.c.l.bf16 %v183
    %v331 = vunpack.c.l.bf16 %v184
    %v332 = vunpack.c.l.bf16 %v185
    %v333 = vunpack.c.l.bf16 %v186
    %v334 = vunpack.c.l.bf16 %v187
    %v335 = vunpack.c.l.bf16 %v188
    %v336 = vunpack.c.l.bf16 %v189
    %v337 = vunpack.c.l.bf16 %v190
    %v338 = vunpack.c.l.bf16 %v191
    %v339 = vunpack.c.l.bf16 %v192
    %v340 = vld [vmem:[#allocation3] sm:$0xff]
    %v341 = vld [vmem:[#allocation3 + $0x8] sm:$0xff]
    %v342 = vld [vmem:[#allocation3 + $0x10] sm:$0xff]
    %v343 = vld [vmem:[#allocation3 + $0x18] sm:$0xff]
    %v344 = vld [vmem:[#allocation3 + $0x20] sm:$0xff]
    %v345 = vld [vmem:[#allocation3 + $0x28] sm:$0xff]
    %v346 = vld [vmem:[#allocation3 + $0x30] sm:$0xff]
    %v347 = vld [vmem:[#allocation3 + $0x38] sm:$0xff]
    %v348 = vld [vmem:[#allocation3 + $0x40] sm:$0xff]
    %v349 = vld [vmem:[#allocation3 + $0x48] sm:$0xff]
    %v350 = vld [vmem:[#allocation3 + $0x50] sm:$0xff]
    %v351 = vld [vmem:[#allocation3 + $0x58] sm:$0xff]
    %v352 = vld [vmem:[#allocation3 + $0x60] sm:$0xff]
    %v353 = vld [vmem:[#allocation3 + $0x68] sm:$0xff]
    %v354 = vld [vmem:[#allocation3 + $0x70] sm:$0xff]
    %v355 = vld [vmem:[#allocation3 + $0x78] sm:$0xff]
    %v356 = vld [vmem:[#allocation3 + $0x80] sm:$0xff]
    %v357 = vld [vmem:[#allocation3 + $0x88] sm:$0xff]
    %v358 = vld [vmem:[#allocation3 + $0x90] sm:$0xff]
    %v359 = vld [vmem:[#allocation3 + $0x98] sm:$0xff]
    %v360 = vld [vmem:[#allocation3 + $0xa0] sm:$0xff]
    %v361 = vld [vmem:[#allocation3 + $0xa8] sm:$0xff]
    %v362 = vld [vmem:[#allocation3 + $0xb0] sm:$0xff]
    %v363 = vld [vmem:[#allocation3 + $0xb8] sm:$0xff]
    %v364 = vld [vmem:[#allocation3 + $0xc0] sm:$0xff]
    %v365 = vld [vmem:[#allocation3 + $0xc8] sm:$0xff]
    %v366 = vld [vmem:[#allocation3 + $0xd0] sm:$0xff]
    %v367 = vld [vmem:[#allocation3 + $0xd8] sm:$0xff]
    %v368 = vld [vmem:[#allocation3 + $0xe0] sm:$0xff]
    %v369 = vld [vmem:[#allocation3 + $0xe8] sm:$0xff]
    %v370 = vld [vmem:[#allocation3 + $0xf0] sm:$0xff]
    %v371 = vld [vmem:[#allocation3 + $0xf8] sm:$0xff]
    %v372 = vld [vmem:[#allocation3 + $0x100] sm:$0xff]
    %v373 = vld [vmem:[#allocation3 + $0x108] sm:$0xff]
    %v374 = vld [vmem:[#allocation3 + $0x110] sm:$0xff]
    %v375 = vld [vmem:[#allocation3 + $0x118] sm:$0xff]
    %v376 = vld [vmem:[#allocation3 + $0x120] sm:$0xff]
    %v377 = vld [vmem:[#allocation3 + $0x128] sm:$0xff]
    %v378 = vld [vmem:[#allocation3 + $0x130] sm:$0xff]
    %v379 = vld [vmem:[#allocation3 + $0x138] sm:$0xff]
    %v380 = vld [vmem:[#allocation3 + $0x140] sm:$0xff]
    %v381 = vld [vmem:[#allocation3 + $0x148] sm:$0xff]
    %v382 = vld [vmem:[#allocation3 + $0x150] sm:$0xff]
    %v383 = vld [vmem:[#allocation3 + $0x158] sm:$0xff]
    %v384 = vld [vmem:[#allocation3 + $0x160] sm:$0xff]
    %v385 = vld [vmem:[#allocation3 + $0x168] sm:$0xff]
    %v386 = vld [vmem:[#allocation3 + $0x170] sm:$0xff]
    %v387 = vld [vmem:[#allocation3 + $0x178] sm:$0xff]
    %v388 = vld [vmem:[#allocation3 + $0x180] sm:$0xff]
    %v389 = vld [vmem:[#allocation3 + $0x188] sm:$0xff]
    %v390 = vld [vmem:[#allocation3 + $0x190] sm:$0xff]
    %v391 = vld [vmem:[#allocation3 + $0x198] sm:$0xff]
    %v392 = vld [vmem:[#allocation3 + $0x1a0] sm:$0xff]
    %v393 = vld [vmem:[#allocation3 + $0x1a8] sm:$0xff]
    %v394 = vld [vmem:[#allocation3 + $0x1b0] sm:$0xff]
    %v395 = vld [vmem:[#allocation3 + $0x1b8] sm:$0xff]
    %v396 = vld [vmem:[#allocation3 + $0x1c0] sm:$0xff]
    %v397 = vld [vmem:[#allocation3 + $0x1c8] sm:$0xff]
    %v398 = vld [vmem:[#allocation3 + $0x1d0] sm:$0xff]
    %v399 = vld [vmem:[#allocation3 + $0x1d8] sm:$0xff]
    %v400 = vld [vmem:[#allocation3 + $0x1e0] sm:$0xff]
    %v401 = vld [vmem:[#allocation3 + $0x1e8] sm:$0xff]
    %v402 = vld [vmem:[#allocation3 + $0x1f0] sm:$0xff]
    %v403 = vld [vmem:[#allocation3 + $0x1f8] sm:$0xff]
    %v404 = vld [vmem:[#allocation3 + $0x200] sm:$0xff]
    %v405 = vld [vmem:[#allocation3 + $0x208] sm:$0xff]
    %v406 = vld [vmem:[#allocation3 + $0x210] sm:$0xff]
    %v407 = vld [vmem:[#allocation3 + $0x218] sm:$0xff]
    %v408 = vld [vmem:[#allocation3 + $0x220] sm:$0xff]
    %v409 = vld [vmem:[#allocation3 + $0x228] sm:$0xff]
    %v410 = vld [vmem:[#allocation3 + $0x230] sm:$0xff]
    %v411 = vld [vmem:[#allocation3 + $0x238] sm:$0xff]
    %v412 = vld [vmem:[#allocation3 + $0x240] sm:$0xff]
    %v413 = vld [vmem:[#allocation3 + $0x248] sm:$0xff]
    %v414 = vld [vmem:[#allocation3 + $0x250] sm:$0xff]
    %v415 = vld [vmem:[#allocation3 + $0x258] sm:$0xff]
    %v416 = vld [vmem:[#allocation3 + $0x260] sm:$0xff]
    %v417 = vld [vmem:[#allocation3 + $0x268] sm:$0xff]
    %v418 = vld [vmem:[#allocation3 + $0x270] sm:$0xff]
    %v419 = vld [vmem:[#allocation3 + $0x278] sm:$0xff]
    %v420 = vld [vmem:[#allocation3 + $0x280] sm:$0xff]
    %v421 = vld [vmem:[#allocation3 + $0x288] sm:$0xff]
    %v422 = vld [vmem:[#allocation3 + $0x290] sm:$0xff]
    %v423 = vld [vmem:[#allocation3 + $0x298] sm:$0xff]
    %v424 = vld [vmem:[#allocation3 + $0x2a0] sm:$0xff]
    %v425 = vld [vmem:[#allocation3 + $0x2a8] sm:$0xff]
    %v426 = vld [vmem:[#allocation3 + $0x2b0] sm:$0xff]
    %v427 = vld [vmem:[#allocation3 + $0x2b8] sm:$0xff]
    %v428 = vld [vmem:[#allocation3 + $0x2c0] sm:$0xff]
    %v429 = vld [vmem:[#allocation3 + $0x2c8] sm:$0xff]
    %v430 = vld [vmem:[#allocation3 + $0x2d0] sm:$0xff]
    %v431 = vld [vmem:[#allocation3 + $0x2d8] sm:$0xff]
    %v432 = vld [vmem:[#allocation3 + $0x2e0] sm:$0xff]
    %v433 = vld [vmem:[#allocation3 + $0x2e8] sm:$0xff]
    %v434 = vld [vmem:[#allocation3 + $0x2f0] sm:$0xff]
    %v435 = vld [vmem:[#allocation3 + $0x2f8] sm:$0xff]
    %v436 = vld [vmem:[#allocation3 + $0x300] sm:$0xff]
    %v437 = vld [vmem:[#allocation3 + $0x308] sm:$0xff]
    %v438 = vld [vmem:[#allocation3 + $0x310] sm:$0xff]
    %v439 = vld [vmem:[#allocation3 + $0x318] sm:$0xff]
    %v440 = vld [vmem:[#allocation3 + $0x320] sm:$0xff]
    %v441 = vld [vmem:[#allocation3 + $0x328] sm:$0xff]
    %v442 = vld [vmem:[#allocation3 + $0x330] sm:$0xff]
    %v443 = vld [vmem:[#allocation3 + $0x338] sm:$0xff]
    %v444 = vld [vmem:[#allocation3 + $0x340] sm:$0xff]
    %v445 = vld [vmem:[#allocation3 + $0x348] sm:$0xff]
    %v446 = vld [vmem:[#allocation3 + $0x350] sm:$0xff]
    %v447 = vld [vmem:[#allocation3 + $0x358] sm:$0xff]
    %v448 = vld [vmem:[#allocation3 + $0x360] sm:$0xff]
    %v449 = vld [vmem:[#allocation3 + $0x368] sm:$0xff]
    %v450 = vld [vmem:[#allocation3 + $0x370] sm:$0xff]
    %v451 = vld [vmem:[#allocation3 + $0x378] sm:$0xff]
    %v452 = vld [vmem:[#allocation3 + $0x380] sm:$0xff]
    %v453 = vld [vmem:[#allocation3 + $0x388] sm:$0xff]
    %v454 = vld [vmem:[#allocation3 + $0x390] sm:$0xff]
    %v455 = vld [vmem:[#allocation3 + $0x398] sm:$0xff]
    %v456 = vld [vmem:[#allocation3 + $0x3a0] sm:$0xff]
    %v457 = vld [vmem:[#allocation3 + $0x3a8] sm:$0xff]
    %v458 = vld [vmem:[#allocation3 + $0x3b0] sm:$0xff]
    %v459 = vld [vmem:[#allocation3 + $0x3b8] sm:$0xff]
    %v460 = vld [vmem:[#allocation3 + $0x3c0] sm:$0xff]
    %v461 = vld [vmem:[#allocation3 + $0x3c8] sm:$0xff]
    %v462 = vld [vmem:[#allocation3 + $0x3d0] sm:$0xff]
    %v463 = vld [vmem:[#allocation3 + $0x3d8] sm:$0xff]
    %v464 = vld [vmem:[#allocation3 + $0x3e0] sm:$0xff]
    %v465 = vld [vmem:[#allocation3 + $0x3e8] sm:$0xff]
    %v466 = vld [vmem:[#allocation3 + $0x3f0] sm:$0xff]
    %v467 = vld [vmem:[#allocation3 + $0x3f8] sm:$0xff]
    %v468 = vld [vmem:[#allocation3 + $0x400] sm:$0xff]
    %v469 = vld [vmem:[#allocation3 + $0x408] sm:$0xff]
    %v470 = vld [vmem:[#allocation3 + $0x410] sm:$0xff]
    %v471 = vld [vmem:[#allocation3 + $0x418] sm:$0xff]
    %v472 = vld [vmem:[#allocation3 + $0x420] sm:$0xff]
    %v473 = vld [vmem:[#allocation3 + $0x428] sm:$0xff]
    %v474 = vld [vmem:[#allocation3 + $0x430] sm:$0xff]
    %v475 = vld [vmem:[#allocation3 + $0x438] sm:$0xff]
    %v476 = vld [vmem:[#allocation3 + $0x440] sm:$0xff]
    %v477 = vld [vmem:[#allocation3 + $0x448] sm:$0xff]
    %v478 = vld [vmem:[#allocation3 + $0x450] sm:$0xff]
    %v479 = vld [vmem:[#allocation3 + $0x458] sm:$0xff]
    %v480 = vld [vmem:[#allocation3 + $0x460] sm:$0xff]
    %v481 = vld [vmem:[#allocation3 + $0x468] sm:$0xff]
    %v482 = vld [vmem:[#allocation3 + $0x470] sm:$0xff]
    %v483 = vld [vmem:[#allocation3 + $0x478] sm:$0xff]
    %v484 = vld [vmem:[#allocation3 + $0x480] sm:$0xff]
    %v485 = vld [vmem:[#allocation3 + $0x488] sm:$0xff]
    %v486 = vld [vmem:[#allocation3 + $0x490] sm:$0xff]
    %v487 = vmul.f32 %v340, %v193
    %v488 = vmul.f32 %v341, %v194
    %v489 = vmul.f32 %v342, %v195
    %v490 = vmul.f32 %v343, %v196
    %v491 = vmul.f32 %v344, %v197
    %v492 = vmul.f32 %v345, %v198
    %v493 = vmul.f32 %v346, %v199
    %v494 = vmul.f32 %v347, %v200
    %v495 = vmul.f32 %v348, %v201
    %v496 = vmul.f32 %v349, %v202
    %v497 = vmul.f32 %v350, %v203
    %v498 = vmul.f32 %v351, %v204
    %v499 = vmul.f32 %v352, %v205
    %v500 = vmul.f32 %v353, %v206
    %v501 = vmul.f32 %v354, %v207
    %v502 = vmul.f32 %v355, %v208
    %v503 = vmul.f32 %v356, %v209
    %v504 = vmul.f32 %v357, %v210
    %v505 = vmul.f32 %v358, %v211
    %v506 = vmul.f32 %v359, %v212
    %v507 = vmul.f32 %v360, %v213
    %v508 = vmul.f32 %v361, %v214
    %v509 = vmul.f32 %v362, %v215
    %v510 = vmul.f32 %v363, %v216
    %v511 = vmul.f32 %v364, %v217
    %v512 = vmul.f32 %v365, %v218
    %v513 = vmul.f32 %v366, %v219
    %v514 = vmul.f32 %v367, %v220
    %v515 = vmul.f32 %v368, %v221
    %v516 = vmul.f32 %v369, %v222
    %v517 = vmul.f32 %v370, %v223
    %v518 = vmul.f32 %v371, %v224
    %v519 = vmul.f32 %v372, %v225
    %v520 = vmul.f32 %v373, %v226
    %v521 = vmul.f32 %v374, %v227
    %v522 = vmul.f32 %v375, %v228
    %v523 = vmul.f32 %v376, %v229
    %v524 = vmul.f32 %v377, %v230
    %v525 = vmul.f32 %v378, %v231
    %v526 = vmul.f32 %v379, %v232
    %v527 = vmul.f32 %v380, %v233
    %v528 = vmul.f32 %v381, %v234
    %v529 = vmul.f32 %v382, %v235
    %v530 = vmul.f32 %v383, %v236
    %v531 = vmul.f32 %v384, %v237
    %v532 = vmul.f32 %v385, %v238
    %v533 = vmul.f32 %v386, %v239
    %v534 = vmul.f32 %v387, %v240
    %v535 = vmul.f32 %v388, %v241
    %v536 = vmul.f32 %v389, %v242
    %v537 = vmul.f32 %v390, %v243
    %v538 = vmul.f32 %v391, %v244
    %v539 = vmul.f32 %v392, %v245
    %v540 = vmul.f32 %v393, %v246
    %v541 = vmul.f32 %v394, %v247
    %v542 = vmul.f32 %v395, %v248
    %v543 = vmul.f32 %v396, %v249
    %v544 = vmul.f32 %v397, %v250
    %v545 = vmul.f32 %v398, %v251
    %v546 = vmul.f32 %v399, %v252
    %v547 = vmul.f32 %v400, %v253
    %v548 = vmul.f32 %v401, %v254
    %v549 = vmul.f32 %v402, %v255
    %v550 = vmul.f32 %v403, %v256
    %v551 = vmul.f32 %v404, %v257
    %v552 = vmul.f32 %v405, %v258
    %v553 = vmul.f32 %v406, %v259
    %v554 = vmul.f32 %v407, %v260
    %v555 = vmul.f32 %v408, %v261
    %v556 = vmul.f32 %v409, %v262
    %v557 = vmul.f32 %v410, %v263
    %v558 = vmul.f32 %v411, %v264
    %v559 = vmul.f32 %v412, %v265
    %v560 = vmul.f32 %v413, %v266
    %v561 = vmul.f32 %v414, %v267
    %v562 = vmul.f32 %v415, %v268
    %v563 = vmul.f32 %v416, %v269
    %v564 = vmul.f32 %v417, %v270
    %v565 = vmul.f32 %v418, %v271
    %v566 = vmul.f32 %v419, %v272
    %v567 = vmul.f32 %v420, %v273
    %v568 = vmul.f32 %v421, %v274
    %v569 = vmul.f32 %v422, %v275
    %v570 = vmul.f32 %v423, %v276
    %v571 = vmul.f32 %v424, %v277
    %v572 = vmul.f32 %v425, %v278
    %v573 = vmul.f32 %v426, %v279
    %v574 = vmul.f32 %v427, %v280
    %v575 = vmul.f32 %v428, %v281
    %v576 = vmul.f32 %v429, %v282
    %v577 = vmul.f32 %v430, %v283
    %v578 = vmul.f32 %v431, %v284
    %v579 = vmul.f32 %v432, %v285
    %v580 = vmul.f32 %v433, %v286
    %v581 = vmul.f32 %v434, %v287
    %v582 = vmul.f32 %v435, %v288
    %v583 = vmul.f32 %v436, %v289
    %v584 = vmul.f32 %v437, %v290
    %v585 = vmul.f32 %v438, %v291
    %v586 = vmul.f32 %v439, %v292
    %v587 = vmul.f32 %v440, %v293
    %v588 = vmul.f32 %v441, %v294
    %v589 = vmul.f32 %v442, %v295
    %v590 = vmul.f32 %v443, %v296
    %v591 = vmul.f32 %v444, %v297
    %v592 = vmul.f32 %v445, %v298
    %v593 = vmul.f32 %v446, %v299
    %v594 = vmul.f32 %v447, %v300
    %v595 = vmul.f32 %v448, %v301
    %v596 = vmul.f32 %v449, %v302
    %v597 = vmul.f32 %v450, %v303
    %v598 = vmul.f32 %v451, %v304
    %v599 = vmul.f32 %v452, %v305
    %v600 = vmul.f32 %v453, %v306
    %v601 = vmul.f32 %v454, %v307
    %v602 = vmul.f32 %v455, %v308
    %v603 = vmul.f32 %v456, %v309
    %v604 = vmul.f32 %v457, %v310
    %v605 = vmul.f32 %v458, %v311
    %v606 = vmul.f32 %v459, %v312
    %v607 = vmul.f32 %v460, %v313
    %v608 = vmul.f32 %v461, %v314
    %v609 = vmul.f32 %v462, %v315
    %v610 = vmul.f32 %v463, %v316
    %v611 = vmul.f32 %v464, %v317
    %v612 = vmul.f32 %v465, %v318
    %v613 = vmul.f32 %v466, %v319
    %v614 = vmul.f32 %v467, %v320
    %v615 = vmul.f32 %v468, %v321
    %v616 = vmul.f32 %v469, %v322
    %v617 = vmul.f32 %v470, %v323
    %v618 = vmul.f32 %v471, %v324
    %v619 = vmul.f32 %v472, %v325
    %v620 = vmul.f32 %v473, %v326
    %v621 = vmul.f32 %v474, %v327
    %v622 = vmul.f32 %v475, %v328
    %v623 = vmul.f32 %v476, %v329
    %v624 = vmul.f32 %v477, %v330
    %v625 = vmul.f32 %v478, %v331
    %v626 = vmul.f32 %v479, %v332
    %v627 = vmul.f32 %v480, %v333
    %v628 = vmul.f32 %v481, %v334
    %v629 = vmul.f32 %v482, %v335
    %v630 = vmul.f32 %v483, %v336
    %v631 = vmul.f32 %v484, %v337
    %v632 = vmul.f32 %v485, %v338
    %v633 = vmul.f32 %v486, %v339
    %v634 = vld [vmem:[#allocation2] sm:$0xff]
    %v635 = vadd.f32 %v487, %v488
    %v636 = vadd.f32 %v635, %v489
    %v637 = vadd.f32 %v636, %v490
    %v638 = vadd.f32 %v637, %v491
    %v639 = vadd.f32 %v638, %v492
    %v640 = vadd.f32 %v639, %v493
    %v641 = vadd.f32 %v640, %v494
    %v642 = vadd.f32 %v641, %v495
    %v643 = vadd.f32 %v642, %v496
    %v644 = vadd.f32 %v643, %v497
    %v645 = vadd.f32 %v644, %v498
    %v646 = vadd.f32 %v645, %v499
    %v647 = vadd.f32 %v646, %v500
    %v648 = vadd.f32 %v647, %v501
    %v649 = vadd.f32 %v648, %v502
    %v650 = vadd.f32 %v649, %v503
    %v651 = vadd.f32 %v650, %v504
    %v652 = vadd.f32 %v651, %v505
    %v653 = vadd.f32 %v652, %v506
    %v654 = vadd.f32 %v653, %v507
    %v655 = vadd.f32 %v654, %v508
    %v656 = vadd.f32 %v655, %v509
    %v657 = vadd.f32 %v656, %v510
    %v658 = vadd.f32 %v657, %v511
    %v659 = vadd.f32 %v658, %v512
    %v660 = vadd.f32 %v659, %v513
    %v661 = vadd.f32 %v660, %v514
    %v662 = vadd.f32 %v661, %v515
    %v663 = vadd.f32 %v662, %v516
    %v664 = vadd.f32 %v663, %v517
    %v665 = vadd.f32 %v664, %v518
    %v666 = vadd.f32 %v665, %v519
    %v667 = vadd.f32 %v666, %v520
    %v668 = vadd.f32 %v667, %v521
    %v669 = vadd.f32 %v668, %v522
    %v670 = vadd.f32 %v669, %v523
    %v671 = vadd.f32 %v670, %v524
    %v672 = vadd.f32 %v671, %v525
    %v673 = vadd.f32 %v672, %v526
    %v674 = vadd.f32 %v673, %v527
    %v675 = vadd.f32 %v674, %v528
    %v676 = vadd.f32 %v675, %v529
    %v677 = vadd.f32 %v676, %v530
    %v678 = vadd.f32 %v677, %v531
    %v679 = vadd.f32 %v678, %v532
    %v680 = vadd.f32 %v679, %v533
    %v681 = vadd.f32 %v680, %v534
    %v682 = vadd.f32 %v681, %v535
    %v683 = vadd.f32 %v682, %v536
    %v684 = vadd.f32 %v683, %v537
    %v685 = vadd.f32 %v684, %v538
    %v686 = vadd.f32 %v685, %v539
    %v687 = vadd.f32 %v686, %v540
    %v688 = vadd.f32 %v687, %v541
    %v689 = vadd.f32 %v688, %v542
    %v690 = vadd.f32 %v689, %v543
    %v691 = vadd.f32 %v690, %v544
    %v692 = vadd.f32 %v691, %v545
    %v693 = vadd.f32 %v692, %v546
    %v694 = vadd.f32 %v693, %v547
    %v695 = vadd.f32 %v694, %v548
    %v696 = vadd.f32 %v695, %v549
    %v697 = vadd.f32 %v696, %v550
    %v698 = vadd.f32 %v697, %v551
    %v699 = vadd.f32 %v698, %v552
    %v700 = vadd.f32 %v699, %v553
    %v701 = vadd.f32 %v700, %v554
    %v702 = vadd.f32 %v701, %v555
    %v703 = vadd.f32 %v702, %v556
    %v704 = vadd.f32 %v703, %v557
    %v705 = vadd.f32 %v704, %v558
    %v706 = vadd.f32 %v705, %v559
    %v707 = vadd.f32 %v706, %v560
    %v708 = vadd.f32 %v707, %v561
    %v709 = vadd.f32 %v708, %v562
    %v710 = vadd.f32 %v709, %v563
    %v711 = vadd.f32 %v710, %v564
    %v712 = vadd.f32 %v711, %v565
    %v713 = vadd.f32 %v712, %v566
    %v714 = vadd.f32 %v713, %v567
    %v715 = vadd.f32 %v714, %v568
    %v716 = vadd.f32 %v715, %v569
    %v717 = vadd.f32 %v716, %v570
    %v718 = vadd.f32 %v717, %v571
    %v719 = vadd.f32 %v718, %v572
    %v720 = vadd.f32 %v719, %v573
    %v721 = vadd.f32 %v720, %v574
    %v722 = vadd.f32 %v721, %v575
    %v723 = vadd.f32 %v722, %v576
    %v724 = vadd.f32 %v723, %v577
    %v725 = vadd.f32 %v724, %v578
    %v726 = vadd.f32 %v725, %v579
    %v727 = vadd.f32 %v726, %v580
    %v728 = vadd.f32 %v727, %v581
    %v729 = vadd.f32 %v728, %v582
    %v730 = vadd.f32 %v729, %v583
    %v731 = vadd.f32 %v730, %v584
    %v732 = vadd.f32 %v731, %v585
    %v733 = vadd.f32 %v732, %v586
    %v734 = vadd.f32 %v733, %v587
    %v735 = vadd.f32 %v734, %v588
    %v736 = vadd.f32 %v735, %v589
    %v737 = vadd.f32 %v736, %v590
    %v738 = vadd.f32 %v737, %v591
    %v739 = vadd.f32 %v738, %v592
    %v740 = vadd.f32 %v739, %v593
    %v741 = vadd.f32 %v740, %v594
    %v742 = vadd.f32 %v741, %v595
    %v743 = vadd.f32 %v742, %v596
    %v744 = vadd.f32 %v743, %v597
    %v745 = vadd.f32 %v744, %v598
    %v746 = vadd.f32 %v745, %v599
    %v747 = vadd.f32 %v746, %v600
    %v748 = vadd.f32 %v747, %v601
    %v749 = vadd.f32 %v748, %v602
    %v750 = vadd.f32 %v749, %v603
    %v751 = vadd.f32 %v750, %v604
    %v752 = vadd.f32 %v751, %v605
    %v753 = vadd.f32 %v752, %v606
    %v754 = vadd.f32 %v753, %v607
    %v755 = vadd.f32 %v754, %v608
    %v756 = vadd.f32 %v755, %v609
    %v757 = vadd.f32 %v756, %v610
    %v758 = vadd.f32 %v757, %v611
    %v759 = vadd.f32 %v758, %v612
    %v760 = vadd.f32 %v759, %v613
    %v761 = vadd.f32 %v760, %v614
    %v762 = vadd.f32 %v761, %v615
    %v763 = vadd.f32 %v762, %v616
    %v764 = vadd.f32 %v763, %v617
    %v765 = vadd.f32 %v764, %v618
    %v766 = vadd.f32 %v765, %v619
    %v767 = vadd.f32 %v766, %v620
    %v768 = vadd.f32 %v767, %v621
    %v769 = vadd.f32 %v768, %v622
    %v770 = vadd.f32 %v769, %v623
    %v771 = vadd.f32 %v770, %v624
    %v772 = vadd.f32 %v771, %v625
    %v773 = vadd.f32 %v772, %v626
    %v774 = vadd.f32 %v773, %v627
    %v775 = vadd.f32 %v774, %v628
    %v776 = vadd.f32 %v775, %v629
    %v777 = vadd.f32 %v776, %v630
    %v778 = vadd.f32 %v777, %v631
    %v779 = vadd.f32 %v778, %v632
    %v780 = vadd.f32 %v779, %v633
    %v781 = vadd.f32 %v634, %v780
    %782 = vst [vmem:[#allocation2] sm:$0xff] %v781
    %s783 = scalar_lea.vmem [#allocation3], 1176
    %v784 = vld [vmem:[%s783] sm:$0xff]
    %v785 = vld [vmem:[%s783 + $0x8] sm:$0xff]
    %v786 = vld [vmem:[%s783 + $0x10] sm:$0xff]
    %v787 = vld [vmem:[%s783 + $0x18] sm:$0xff]
    %v788 = vld [vmem:[%s783 + $0x20] sm:$0xff]
    %v789 = vld [vmem:[%s783 + $0x28] sm:$0xff]
    %v790 = vld [vmem:[%s783 + $0x30] sm:$0xff]
    %v791 = vld [vmem:[%s783 + $0x38] sm:$0xff]
    %v792 = vld [vmem:[%s783 + $0x40] sm:$0xff]
    %v793 = vld [vmem:[%s783 + $0x48] sm:$0xff]
    %v794 = vld [vmem:[%s783 + $0x50] sm:$0xff]
    %v795 = vld [vmem:[%s783 + $0x58] sm:$0xff]
    %v796 = vld [vmem:[%s783 + $0x60] sm:$0xff]
    %v797 = vld [vmem:[%s783 + $0x68] sm:$0xff]
    %v798 = vld [vmem:[%s783 + $0x70] sm:$0xff]
    %v799 = vld [vmem:[%s783 + $0x78] sm:$0xff]
    %v800 = vld [vmem:[%s783 + $0x80] sm:$0xff]
    %v801 = vld [vmem:[%s783 + $0x88] sm:$0xff]
    %v802 = vld [vmem:[%s783 + $0x90] sm:$0xff]
    %v803 = vld [vmem:[%s783 + $0x98] sm:$0xff]
    %v804 = vld [vmem:[%s783 + $0xa0] sm:$0xff]
    %v805 = vld [vmem:[%s783 + $0xa8] sm:$0xff]
    %v806 = vld [vmem:[%s783 + $0xb0] sm:$0xff]
    %v807 = vld [vmem:[%s783 + $0xb8] sm:$0xff]
    %v808 = vld [vmem:[%s783 + $0xc0] sm:$0xff]
    %v809 = vld [vmem:[%s783 + $0xc8] sm:$0xff]
    %v810 = vld [vmem:[%s783 + $0xd0] sm:$0xff]
    %v811 = vld [vmem:[%s783 + $0xd8] sm:$0xff]
    %v812 = vld [vmem:[%s783 + $0xe0] sm:$0xff]
    %v813 = vld [vmem:[%s783 + $0xe8] sm:$0xff]
    %v814 = vld [vmem:[%s783 + $0xf0] sm:$0xff]
    %v815 = vld [vmem:[%s783 + $0xf8] sm:$0xff]
    %v816 = vld [vmem:[%s783 + $0x100] sm:$0xff]
    %v817 = vld [vmem:[%s783 + $0x108] sm:$0xff]
    %v818 = vld [vmem:[%s783 + $0x110] sm:$0xff]
    %v819 = vld [vmem:[%s783 + $0x118] sm:$0xff]
    %v820 = vld [vmem:[%s783 + $0x120] sm:$0xff]
    %v821 = vld [vmem:[%s783 + $0x128] sm:$0xff]
    %v822 = vld [vmem:[%s783 + $0x130] sm:$0xff]
    %v823 = vld [vmem:[%s783 + $0x138] sm:$0xff]
    %v824 = vld [vmem:[%s783 + $0x140] sm:$0xff]
    %v825 = vld [vmem:[%s783 + $0x148] sm:$0xff]
    %v826 = vld [vmem:[%s783 + $0x150] sm:$0xff]
    %v827 = vld [vmem:[%s783 + $0x158] sm:$0xff]
    %v828 = vld [vmem:[%s783 + $0x160] sm:$0xff]
    %v829 = vld [vmem:[%s783 + $0x168] sm:$0xff]
    %v830 = vld [vmem:[%s783 + $0x170] sm:$0xff]
    %v831 = vld [vmem:[%s783 + $0x178] sm:$0xff]
    %v832 = vld [vmem:[%s783 + $0x180] sm:$0xff]
    %v833 = vld [vmem:[%s783 + $0x188] sm:$0xff]
    %v834 = vld [vmem:[%s783 + $0x190] sm:$0xff]
    %v835 = vld [vmem:[%s783 + $0x198] sm:$0xff]
    %v836 = vld [vmem:[%s783 + $0x1a0] sm:$0xff]
    %v837 = vld [vmem:[%s783 + $0x1a8] sm:$0xff]
    %v838 = vld [vmem:[%s783 + $0x1b0] sm:$0xff]
    %v839 = vld [vmem:[%s783 + $0x1b8] sm:$0xff]
    %v840 = vld [vmem:[%s783 + $0x1c0] sm:$0xff]
    %v841 = vld [vmem:[%s783 + $0x1c8] sm:$0xff]
    %v842 = vld [vmem:[%s783 + $0x1d0] sm:$0xff]
    %v843 = vld [vmem:[%s783 + $0x1d8] sm:$0xff]
    %v844 = vld [vmem:[%s783 + $0x1e0] sm:$0xff]
    %v845 = vld [vmem:[%s783 + $0x1e8] sm:$0xff]
    %v846 = vld [vmem:[%s783 + $0x1f0] sm:$0xff]
    %v847 = vld [vmem:[%s783 + $0x1f8] sm:$0xff]
    %v848 = vld [vmem:[%s783 + $0x200] sm:$0xff]
    %v849 = vld [vmem:[%s783 + $0x208] sm:$0xff]
    %v850 = vld [vmem:[%s783 + $0x210] sm:$0xff]
    %v851 = vld [vmem:[%s783 + $0x218] sm:$0xff]
    %v852 = vld [vmem:[%s783 + $0x220] sm:$0xff]
    %v853 = vld [vmem:[%s783 + $0x228] sm:$0xff]
    %v854 = vld [vmem:[%s783 + $0x230] sm:$0xff]
    %v855 = vld [vmem:[%s783 + $0x238] sm:$0xff]
    %v856 = vld [vmem:[%s783 + $0x240] sm:$0xff]
    %v857 = vld [vmem:[%s783 + $0x248] sm:$0xff]
    %v858 = vld [vmem:[%s783 + $0x250] sm:$0xff]
    %v859 = vld [vmem:[%s783 + $0x258] sm:$0xff]
    %v860 = vld [vmem:[%s783 + $0x260] sm:$0xff]
    %v861 = vld [vmem:[%s783 + $0x268] sm:$0xff]
    %v862 = vld [vmem:[%s783 + $0x270] sm:$0xff]
    %v863 = vld [vmem:[%s783 + $0x278] sm:$0xff]
    %v864 = vld [vmem:[%s783 + $0x280] sm:$0xff]
    %v865 = vld [vmem:[%s783 + $0x288] sm:$0xff]
    %v866 = vld [vmem:[%s783 + $0x290] sm:$0xff]
    %v867 = vld [vmem:[%s783 + $0x298] sm:$0xff]
    %v868 = vld [vmem:[%s783 + $0x2a0] sm:$0xff]
    %v869 = vld [vmem:[%s783 + $0x2a8] sm:$0xff]
    %v870 = vld [vmem:[%s783 + $0x2b0] sm:$0xff]
    %v871 = vld [vmem:[%s783 + $0x2b8] sm:$0xff]
    %v872 = vld [vmem:[%s783 + $0x2c0] sm:$0xff]
    %v873 = vld [vmem:[%s783 + $0x2c8] sm:$0xff]
    %v874 = vld [vmem:[%s783 + $0x2d0] sm:$0xff]
    %v875 = vld [vmem:[%s783 + $0x2d8] sm:$0xff]
    %v876 = vld [vmem:[%s783 + $0x2e0] sm:$0xff]
    %v877 = vld [vmem:[%s783 + $0x2e8] sm:$0xff]
    %v878 = vld [vmem:[%s783 + $0x2f0] sm:$0xff]
    %v879 = vld [vmem:[%s783 + $0x2f8] sm:$0xff]
    %v880 = vld [vmem:[%s783 + $0x300] sm:$0xff]
    %v881 = vld [vmem:[%s783 + $0x308] sm:$0xff]
    %v882 = vld [vmem:[%s783 + $0x310] sm:$0xff]
    %v883 = vld [vmem:[%s783 + $0x318] sm:$0xff]
    %v884 = vld [vmem:[%s783 + $0x320] sm:$0xff]
    %v885 = vld [vmem:[%s783 + $0x328] sm:$0xff]
    %v886 = vld [vmem:[%s783 + $0x330] sm:$0xff]
    %v887 = vld [vmem:[%s783 + $0x338] sm:$0xff]
    %v888 = vld [vmem:[%s783 + $0x340] sm:$0xff]
    %v889 = vld [vmem:[%s783 + $0x348] sm:$0xff]
    %v890 = vld [vmem:[%s783 + $0x350] sm:$0xff]
    %v891 = vld [vmem:[%s783 + $0x358] sm:$0xff]
    %v892 = vld [vmem:[%s783 + $0x360] sm:$0xff]
    %v893 = vld [vmem:[%s783 + $0x368] sm:$0xff]
    %v894 = vld [vmem:[%s783 + $0x370] sm:$0xff]
    %v895 = vld [vmem:[%s783 + $0x378] sm:$0xff]
    %v896 = vld [vmem:[%s783 + $0x380] sm:$0xff]
    %v897 = vld [vmem:[%s783 + $0x388] sm:$0xff]
    %v898 = vld [vmem:[%s783 + $0x390] sm:$0xff]
    %v899 = vld [vmem:[%s783 + $0x398] sm:$0xff]
    %v900 = vld [vmem:[%s783 + $0x3a0] sm:$0xff]
    %v901 = vld [vmem:[%s783 + $0x3a8] sm:$0xff]
    %v902 = vld [vmem:[%s783 + $0x3b0] sm:$0xff]
    %v903 = vld [vmem:[%s783 + $0x3b8] sm:$0xff]
    %v904 = vld [vmem:[%s783 + $0x3c0] sm:$0xff]
    %v905 = vld [vmem:[%s783 + $0x3c8] sm:$0xff]
    %v906 = vld [vmem:[%s783 + $0x3d0] sm:$0xff]
    %v907 = vld [vmem:[%s783 + $0x3d8] sm:$0xff]
    %v908 = vld [vmem:[%s783 + $0x3e0] sm:$0xff]
    %v909 = vld [vmem:[%s783 + $0x3e8] sm:$0xff]
    %v910 = vld [vmem:[%s783 + $0x3f0] sm:$0xff]
    %v911 = vld [vmem:[%s783 + $0x3f8] sm:$0xff]
    %v912 = vld [vmem:[%s783 + $0x400] sm:$0xff]
    %v913 = vld [vmem:[%s783 + $0x408] sm:$0xff]
    %v914 = vld [vmem:[%s783 + $0x410] sm:$0xff]
    %v915 = vld [vmem:[%s783 + $0x418] sm:$0xff]
    %v916 = vld [vmem:[%s783 + $0x420] sm:$0xff]
    %v917 = vld [vmem:[%s783 + $0x428] sm:$0xff]
    %v918 = vld [vmem:[%s783 + $0x430] sm:$0xff]
    %v919 = vld [vmem:[%s783 + $0x438] sm:$0xff]
    %v920 = vld [vmem:[%s783 + $0x440] sm:$0xff]
    %v921 = vld [vmem:[%s783 + $0x448] sm:$0xff]
    %v922 = vld [vmem:[%s783 + $0x450] sm:$0xff]
    %v923 = vld [vmem:[%s783 + $0x458] sm:$0xff]
    %v924 = vld [vmem:[%s783 + $0x460] sm:$0xff]
    %v925 = vld [vmem:[%s783 + $0x468] sm:$0xff]
    %v926 = vld [vmem:[%s783 + $0x470] sm:$0xff]
    %v927 = vld [vmem:[%s783 + $0x478] sm:$0xff]
    %v928 = vld [vmem:[%s783 + $0x480] sm:$0xff]
    %v929 = vld [vmem:[%s783 + $0x488] sm:$0xff]
    %v930 = vld [vmem:[%s783 + $0x490] sm:$0xff]
    %v931 = vmul.f32 %v784, %v193
    %v932 = vmul.f32 %v785, %v194
    %v933 = vmul.f32 %v786, %v195
    %v934 = vmul.f32 %v787, %v196
    %v935 = vmul.f32 %v788, %v197
    %v936 = vmul.f32 %v789, %v198
    %v937 = vmul.f32 %v790, %v199
    %v938 = vmul.f32 %v791, %v200
    %v939 = vmul.f32 %v792, %v201
    %v940 = vmul.f32 %v793, %v202
    %v941 = vmul.f32 %v794, %v203
    %v942 = vmul.f32 %v795, %v204
    %v943 = vmul.f32 %v796, %v205
    %v944 = vmul.f32 %v797, %v206
    %v945 = vmul.f32 %v798, %v207
    %v946 = vmul.f32 %v799, %v208
    %v947 = vmul.f32 %v800, %v209
    %v948 = vmul.f32 %v801, %v210
    %v949 = vmul.f32 %v802, %v211
    %v950 = vmul.f32 %v803, %v212
    %v951 = vmul.f32 %v804, %v213
    %v952 = vmul.f32 %v805, %v214
    %v953 = vmul.f32 %v806, %v215
    %v954 = vmul.f32 %v807, %v216
    %v955 = vmul.f32 %v808, %v217
    %v956 = vmul.f32 %v809, %v218
    %v957 = vmul.f32 %v810, %v219
    %v958 = vmul.f32 %v811, %v220
    %v959 = vmul.f32 %v812, %v221
    %v960 = vmul.f32 %v813, %v222
    %v961 = vmul.f32 %v814, %v223
    %v962 = vmul.f32 %v815, %v224
    %v963 = vmul.f32 %v816, %v225
    %v964 = vmul.f32 %v817, %v226
    %v965 = vmul.f32 %v818, %v227
    %v966 = vmul.f32 %v819, %v228
    %v967 = vmul.f32 %v820, %v229
    %v968 = vmul.f32 %v821, %v230
    %v969 = vmul.f32 %v822, %v231
    %v970 = vmul.f32 %v823, %v232
    %v971 = vmul.f32 %v824, %v233
    %v972 = vmul.f32 %v825, %v234
    %v973 = vmul.f32 %v826, %v235
    %v974 = vmul.f32 %v827, %v236
    %v975 = vmul.f32 %v828, %v237
    %v976 = vmul.f32 %v829, %v238
    %v977 = vmul.f32 %v830, %v239
    %v978 = vmul.f32 %v831, %v240
    %v979 = vmul.f32 %v832, %v241
    %v980 = vmul.f32 %v833, %v242
    %v981 = vmul.f32 %v834, %v243
    %v982 = vmul.f32 %v835, %v244
    %v983 = vmul.f32 %v836, %v245
    %v984 = vmul.f32 %v837, %v246
    %v985 = vmul.f32 %v838, %v247
    %v986 = vmul.f32 %v839, %v248
    %v987 = vmul.f32 %v840, %v249
    %v988 = vmul.f32 %v841, %v250
    %v989 = vmul.f32 %v842, %v251
    %v990 = vmul.f32 %v843, %v252
    %v991 = vmul.f32 %v844, %v253
    %v992 = vmul.f32 %v845, %v254
    %v993 = vmul.f32 %v846, %v255
    %v994 = vmul.f32 %v847, %v256
    %v995 = vmul.f32 %v848, %v257
    %v996 = vmul.f32 %v849, %v258
    %v997 = vmul.f32 %v850, %v259
    %v998 = vmul.f32 %v851, %v260
    %v999 = vmul.f32 %v852, %v261
    %v1000 = vmul.f32 %v853, %v262
    %v1001 = vmul.f32 %v854, %v263
    %v1002 = vmul.f32 %v855, %v264
    %v1003 = vmul.f32 %v856, %v265
    %v1004 = vmul.f32 %v857, %v266
    %v1005 = vmul.f32 %v858, %v267
    %v1006 = vmul.f32 %v859, %v268
    %v1007 = vmul.f32 %v860, %v269
    %v1008 = vmul.f32 %v861, %v270
    %v1009 = vmul.f32 %v862, %v271
    %v1010 = vmul.f32 %v863, %v272
    %v1011 = vmul.f32 %v864, %v273
    %v1012 = vmul.f32 %v865, %v274
    %v1013 = vmul.f32 %v866, %v275
    %v1014 = vmul.f32 %v867, %v276
    %v1015 = vmul.f32 %v868, %v277
    %v1016 = vmul.f32 %v869, %v278
    %v1017 = vmul.f32 %v870, %v279
    %v1018 = vmul.f32 %v871, %v280
    %v1019 = vmul.f32 %v872, %v281
    %v1020 = vmul.f32 %v873, %v282
    %v1021 = vmul.f32 %v874, %v283
    %v1022 = vmul.f32 %v875, %v284
    %v1023 = vmul.f32 %v876, %v285
    %v1024 = vmul.f32 %v877, %v286
    %v1025 = vmul.f32 %v878, %v287
    %v1026 = vmul.f32 %v879, %v288
    %v1027 = vmul.f32 %v880, %v289
    %v1028 = vmul.f32 %v881, %v290
    %v1029 = vmul.f32 %v882, %v291
    %v1030 = vmul.f32 %v883, %v292
    %v1031 = vmul.f32 %v884, %v293
    %v1032 = vmul.f32 %v885, %v294
    %v1033 = vmul.f32 %v886, %v295
    %v1034 = vmul.f32 %v887, %v296
    %v1035 = vmul.f32 %v888, %v297
    %v1036 = vmul.f32 %v889, %v298
    %v1037 = vmul.f32 %v890, %v299
    %v1038 = vmul.f32 %v891, %v300
    %v1039 = vmul.f32 %v892, %v301
    %v1040 = vmul.f32 %v893, %v302
    %v1041 = vmul.f32 %v894, %v303
    %v1042 = vmul.f32 %v895, %v304
    %v1043 = vmul.f32 %v896, %v305
    %v1044 = vmul.f32 %v897, %v306
    %v1045 = vmul.f32 %v898, %v307
    %v1046 = vmul.f32 %v899, %v308
    %v1047 = vmul.f32 %v900, %v309
    %v1048 = vmul.f32 %v901, %v310
    %v1049 = vmul.f32 %v902, %v311
    %v1050 = vmul.f32 %v903, %v312
    %v1051 = vmul.f32 %v904, %v313
    %v1052 = vmul.f32 %v905, %v314
    %v1053 = vmul.f32 %v906, %v315
    %v1054 = vmul.f32 %v907, %v316
    %v1055 = vmul.f32 %v908, %v317
    %v1056 = vmul.f32 %v909, %v318
    %v1057 = vmul.f32 %v910, %v319
    %v1058 = vmul.f32 %v911, %v320
    %v1059 = vmul.f32 %v912, %v321
    %v1060 = vmul.f32 %v913, %v322
    %v1061 = vmul.f32 %v914, %v323
    %v1062 = vmul.f32 %v915, %v324
    %v1063 = vmul.f32 %v916, %v325
    %v1064 = vmul.f32 %v917, %v326
    %v1065 = vmul.f32 %v918, %v327
    %v1066 = vmul.f32 %v919, %v328
    %v1067 = vmul.f32 %v920, %v329
    %v1068 = vmul.f32 %v921, %v330
    %v1069 = vmul.f32 %v922, %v331
    %v1070 = vmul.f32 %v923, %v332
    %v1071 = vmul.f32 %v924, %v333
    %v1072 = vmul.f32 %v925, %v334
    %v1073 = vmul.f32 %v926, %v335
    %v1074 = vmul.f32 %v927, %v336
    %v1075 = vmul.f32 %v928, %v337
    %v1076 = vmul.f32 %v929, %v338
    %v1077 = vmul.f32 %v930, %v339
    %s1078 = scalar_lea.vmem [#allocation2], 8
    %v1079 = vld [vmem:[%s1078] sm:$0xff]
    %v1080 = vadd.f32 %v931, %v932
    %v1081 = vadd.f32 %v1080, %v933
    %v1082 = vadd.f32 %v1081, %v934
    %v1083 = vadd.f32 %v1082, %v935
    %v1084 = vadd.f32 %v1083, %v936
    %v1085 = vadd.f32 %v1084, %v937
    %v1086 = vadd.f32 %v1085, %v938
    %v1087 = vadd.f32 %v1086, %v939
    %v1088 = vadd.f32 %v1087, %v940
    %v1089 = vadd.f32 %v1088, %v941
    %v1090 = vadd.f32 %v1089, %v942
    %v1091 = vadd.f32 %v1090, %v943
    %v1092 = vadd.f32 %v1091, %v944
    %v1093 = vadd.f32 %v1092, %v945
    %v1094 = vadd.f32 %v1093, %v946
    %v1095 = vadd.f32 %v1094, %v947
    %v1096 = vadd.f32 %v1095, %v948
    %v1097 = vadd.f32 %v1096, %v949
    %v1098 = vadd.f32 %v1097, %v950
    %v1099 = vadd.f32 %v1098, %v951
    %v1100 = vadd.f32 %v1099, %v952
    %v1101 = vadd.f32 %v1100, %v953
    %v1102 = vadd.f32 %v1101, %v954
    %v1103 = vadd.f32 %v1102, %v955
    %v1104 = vadd.f32 %v1103, %v956
    %v1105 = vadd.f32 %v1104, %v957
    %v1106 = vadd.f32 %v1105, %v958
    %v1107 = vadd.f32 %v1106, %v959
    %v1108 = vadd.f32 %v1107, %v960
    %v1109 = vadd.f32 %v1108, %v961
    %v1110 = vadd.f32 %v1109, %v962
    %v1111 = vadd.f32 %v1110, %v963
    %v1112 = vadd.f32 %v1111, %v964
    %v1113 = vadd.f32 %v1112, %v965
    %v1114 = vadd.f32 %v1113, %v966
    %v1115 = vadd.f32 %v1114, %v967
    %v1116 = vadd.f32 %v1115, %v968
    %v1117 = vadd.f32 %v1116, %v969
    %v1118 = vadd.f32 %v1117, %v970
    %v1119 = vadd.f32 %v1118, %v971
    %v1120 = vadd.f32 %v1119, %v972
    %v1121 = vadd.f32 %v1120, %v973
    %v1122 = vadd.f32 %v1121, %v974
    %v1123 = vadd.f32 %v1122, %v975
    %v1124 = vadd.f32 %v1123, %v976
    %v1125 = vadd.f32 %v1124, %v977
    %v1126 = vadd.f32 %v1125, %v978
    %v1127 = vadd.f32 %v1126, %v979
    %v1128 = vadd.f32 %v1127, %v980
    %v1129 = vadd.f32 %v1128, %v981
    %v1130 = vadd.f32 %v1129, %v982
    %v1131 = vadd.f32 %v1130, %v983
    %v1132 = vadd.f32 %v1131, %v984
    %v1133 = vadd.f32 %v1132, %v985
    %v1134 = vadd.f32 %v1133, %v986
    %v1135 = vadd.f32 %v1134, %v987
    %v1136 = vadd.f32 %v1135, %v988
    %v1137 = vadd.f32 %v1136, %v989
    %v1138 = vadd.f32 %v1137, %v990
    %v1139 = vadd.f32 %v1138, %v991
    %v1140 = vadd.f32 %v1139, %v992
    %v1141 = vadd.f32 %v1140, %v993
    %v1142 = vadd.f32 %v1141, %v994
    %v1143 = vadd.f32 %v1142, %v995
    %v1144 = vadd.f32 %v1143, %v996
    %v1145 = vadd.f32 %v1144, %v997
    %v1146 = vadd.f32 %v1145, %v998
    %v1147 = vadd.f32 %v1146, %v999
    %v1148 = vadd.f32 %v1147, %v1000
    %v1149 = vadd.f32 %v1148, %v1001
    %v1150 = vadd.f32 %v1149, %v1002
    %v1151 = vadd.f32 %v1150, %v1003
    %v1152 = vadd.f32 %v1151, %v1004
    %v1153 = vadd.f32 %v1152, %v1005
    %v1154 = vadd.f32 %v1153, %v1006
    %v1155 = vadd.f32 %v1154, %v1007
    %v1156 = vadd.f32 %v1155, %v1008
    %v1157 = vadd.f32 %v1156, %v1009
    %v1158 = vadd.f32 %v1157, %v1010
    %v1159 = vadd.f32 %v1158, %v1011
    %v1160 = vadd.f32 %v1159, %v1012
    %v1161 = vadd.f32 %v1160, %v1013
    %v1162 = vadd.f32 %v1161, %v1014
    %v1163 = vadd.f32 %v1162, %v1015
    %v1164 = vadd.f32 %v1163, %v1016
    %v1165 = vadd.f32 %v1164, %v1017
    %v1166 = vadd.f32 %v1165, %v1018
    %v1167 = vadd.f32 %v1166, %v1019
    %v1168 = vadd.f32 %v1167, %v1020
    %v1169 = vadd.f32 %v1168, %v1021
    %v1170 = vadd.f32 %v1169, %v1022
    %v1171 = vadd.f32 %v1170, %v1023
    %v1172 = vadd.f32 %v1171, %v1024
    %v1173 = vadd.f32 %v1172, %v1025
    %v1174 = vadd.f32 %v1173, %v1026
    %v1175 = vadd.f32 %v1174, %v1027
    %v1176 = vadd.f32 %v1175, %v1028
    %v1177 = vadd.f32 %v1176, %v1029
    %v1178 = vadd.f32 %v1177, %v1030
    %v1179 = vadd.f32 %v1178, %v1031
    %v1180 = vadd.f32 %v1179, %v1032
    %v1181 = vadd.f32 %v1180, %v1033
    %v1182 = vadd.f32 %v1181, %v1034
    %v1183 = vadd.f32 %v1182, %v1035
    %v1184 = vadd.f32 %v1183, %v1036
    %v1185 = vadd.f32 %v1184, %v1037
    %v1186 = vadd.f32 %v1185, %v1038
    %v1187 = vadd.f32 %v1186, %v1039
    %v1188 = vadd.f32 %v1187, %v1040
    %v1189 = vadd.f32 %v1188, %v1041
    %v1190 = vadd.f32 %v1189, %v1042
    %v1191 = vadd.f32 %v1190, %v1043
    %v1192 = vadd.f32 %v1191, %v1044
    %v1193 = vadd.f32 %v1192, %v1045
    %v1194 = vadd.f32 %v1193, %v1046
    %v1195 = vadd.f32 %v1194, %v1047
    %v1196 = vadd.f32 %v1195, %v1048
    %v1197 = vadd.f32 %v1196, %v1049
    %v1198 = vadd.f32 %v1197, %v1050
    %v1199 = vadd.f32 %v1198, %v1051
    %v1200 = vadd.f32 %v1199, %v1052
    %v1201 = vadd.f32 %v1200, %v1053
    %v1202 = vadd.f32 %v1201, %v1054
    %v1203 = vadd.f32 %v1202, %v1055
    %v1204 = vadd.f32 %v1203, %v1056
    %v1205 = vadd.f32 %v1204, %v1057
    %v1206 = vadd.f32 %v1205, %v1058
    %v1207 = vadd.f32 %v1206, %v1059
    %v1208 = vadd.f32 %v1207, %v1060
    %v1209 = vadd.f32 %v1208, %v1061
    %v1210 = vadd.f32 %v1209, %v1062
    %v1211 = vadd.f32 %v1210, %v1063
    %v1212 = vadd.f32 %v1211, %v1064
    %v1213 = vadd.f32 %v1212, %v1065
    %v1214 = vadd.f32 %v1213, %v1066
    %v1215 = vadd.f32 %v1214, %v1067
    %v1216 = vadd.f32 %v1215, %v1068
    %v1217 = vadd.f32 %v1216, %v1069
    %v1218 = vadd.f32 %v1217, %v1070
    %v1219 = vadd.f32 %v1218, %v1071
    %v1220 = vadd.f32 %v1219, %v1072
    %v1221 = vadd.f32 %v1220, %v1073
    %v1222 = vadd.f32 %v1221, %v1074
    %v1223 = vadd.f32 %v1222, %v1075
    %v1224 = vadd.f32 %v1223, %v1076
    %v1225 = vadd.f32 %v1224, %v1077
    %v1226 = vadd.f32 %v1079, %v1225
    %1227 = vst [vmem:[%s1078] sm:$0xff] %v1226
    // Predicated region
    $region22: #{_dec_call.1} parent=1 // pred_check
      %p1228 = pneg %p40
    $region23: #{_dec_call.1} parent=1 // pred_check_branch
      %1230 = sbr.rel (%p1228) target = $region25
    $region24: #{_dec_call.1} parent=1 // pred_region
      %v1231 = vld [vmem:[#allocation2] sm:$0xff]
      %v1232 = vld [vmem:[#allocation2 + $0x8] sm:$0xff]
      %1233 = vst [vmem:[#allocation8] sm:$0xff] %v1231
      %1234 = vst [vmem:[#allocation8 + $0x8] sm:$0xff] %v1232
    $region25: #{_dec_call.1} parent=1 // pred_fallthru
      _
    // Predicated region
    $region26: #{_dec_call.1} parent=1 // pred_check
      _
    $region27: #{_dec_call.1} parent=1 // pred_check_branch
      %1236 = sbr.rel (0) target = $region29
    $region28: #{_dec_call.1} parent=1 // pred_region
      %s1238 = ssub.s32 256, 256
      %1239 = vsyncadd [#allocation5], %s1238
      %s1240 = sshll.u32 [#allocation8], 4
      %s1241 = int_to_ptr.vmem [resolvable:$true] %s1240
      %1246 = dma.vmem_to_hbm [thread:$0]  %s1241, 256, %s2, [#allocation5], 128, 128, 8
    $region29: #{_dec_call.1} parent=1 // pred_fallthru
      _
    // Predicated region
    $region30: #{_dec_call.1} parent=1 // pred_check
      _
    $region31: #{_dec_call.1} parent=1 // pred_check_branch
      %1248 = sbr.rel (0) target = $region33
    $region32: #{_dec_call.1} parent=1 // pred_region
      %1249 = dma.done [#allocation5], 256
    $region33: #{_dec_call.1} parent=1 // pred_fallthru
      _
    %1250 = vsyncpa [#allocation4], 1
    %1251 = vsyncpa [#allocation7], 1
    %1252 = vsyncpa [#allocation5], 1

</llo_original>
